<compile_context>
chip_gen: v5e
topology: v5e:2x2
jax: 0.10.0
libtpu: 0.0.40
codegen_flags: <defaults>
</compile_context>

<pallas_src>
import jax
import jax.numpy as jnp
from jax.experimental import pallas as pl
from jax.experimental.pallas import tpu as pltpu


_NEG_BIG = -1e30   # bias for padded classifier columns (vanishes in softmax)
_SLOPE = 0.1       # nn.LeakyReLU(0.1) per get_activation('leaky_relu')


# ----------------------------------------------------------------------------
# Kernel bodies
# ----------------------------------------------------------------------------
def _lrelu(h):
    # LeakyReLU(0.1): max(h, 0.1*h) == where(h > 0, h, 0.1*h) for slope in (0,1)
    return jnp.maximum(h, jnp.float32(_SLOPE) * h)


def _tail_layers(h_bf16, w2_ref, b2_ref, w3_ref, b3_ref, w4_ref, b4_ref,
                 w5_ref, b5_ref, w6_ref, b6_ref, o_ref):
    """Layers 2..6 + log-softmax, writing the output tile."""
    def block(h, w_ref, b_ref):
        z = jnp.dot(h, w_ref[...], preferred_element_type=jnp.float32) + b_ref[...]
        return _lrelu(z).astype(jnp.bfloat16)

    h = block(h_bf16, w2_ref, b2_ref)       # Linear+BN(folded)+act (+Dropout=id)
    h = block(h, w3_ref, b3_ref)            # Linear(128,64 ->128pad)+act
    h = block(h, w4_ref, b4_ref)            # Linear(64,32  ->128pad)+act
    h = block(h, w5_ref, b5_ref)            # Linear(32,32  ->128pad)+act

    logits = jnp.dot(h, w6_ref[...], preferred_element_type=jnp.float32) + b6_ref[...]
    # LogSoftmax(dim=1) over the lane-dense (padded) class axis.
    m = jnp.max(logits, axis=-1, keepdims=True)
    z = logits - m
    lse = jnp.log(jnp.sum(jnp.exp(z), axis=-1, keepdims=True))
    o_ref[...] = (z - lse).astype(o_ref.dtype)


def _mlp_kernel_resident(x_ref,
                         w1_ref, b1_ref, w2_ref, b2_ref, w3_ref, b3_ref,
                         w4_ref, b4_ref, w5_ref, b5_ref, w6_ref, b6_ref,
                         o_ref):
    """All weights VMEM-resident; grid is over batch tiles only."""
    z1 = jnp.dot(x_ref[...], w1_ref[...],
                 preferred_element_type=jnp.float32) + b1_ref[...]
    h = _lrelu(z1).astype(jnp.bfloat16)
    _tail_layers(h, w2_ref, b2_ref, w3_ref, b3_ref, w4_ref, b4_ref,
                 w5_ref, b5_ref, w6_ref, b6_ref, o_ref)


def _mlp_kernel_ktiled(x_ref,
                       w1_ref, b1_ref, w2_ref, b2_ref, w3_ref, b3_ref,
                       w4_ref, b4_ref, w5_ref, b5_ref, w6_ref, b6_ref,
                       o_ref, acc_ref):
    """w1 streamed over a K grid axis; layer-1 accumulates into f32 scratch."""
    k = pl.program_id(1)

    @pl.when(k == 0)
    def _():
        acc_ref[...] = jnp.zeros_like(acc_ref)

    acc_ref[...] += jnp.dot(x_ref[...], w1_ref[...],
                            preferred_element_type=jnp.float32)

    @pl.when(k == pl.num_programs(1) - 1)
    def _():
        h = _lrelu(acc_ref[...] + b1_ref[...]).astype(jnp.bfloat16)
        _tail_layers(h, w2_ref, b2_ref, w3_ref, b3_ref, w4_ref, b4_ref,
                     w5_ref, b5_ref, w6_ref, b6_ref, o_ref)


# ----------------------------------------------------------------------------
# Glue: padding, BN folding, bf16 casting, generation-aware tiling.
# ----------------------------------------------------------------------------
def _round_up(n, m):
    return ((n + m - 1) // m) * m


def _vmem_budget_bytes():
    """Generation-aware VMEM budget (~3/4 of physical, capped at 96 MiB)."""
    try:
        cap = int(pltpu.get_tpu_info().vmem_capacity_bytes)
    except Exception:  # pragma: no cover - conservative (v7x-safe) fallback
        cap = 64 << 20
    return int(min((cap * 3) // 4, 96 << 20))


def _fold_bn(gamma, beta, mean, var, eps=1e-5):
    g = gamma / jnp.sqrt(var + eps)
    be = beta - mean * g
    return g, be


def _pad2d(w, rows, cols):
    return jnp.pad(w, ((0, rows - w.shape[0]), (0, cols - w.shape[1])))


def _pad1d(b, cols):
    return jnp.pad(b, (0, cols - b.shape[0]))


def _prepare_operands(params, input_size, f_pad):
    """Fold BN into layers 1/2, pad every dim to lane-dense 128 multiples,
    cast weights to bf16 (biases stay f32)."""
    num_classes = params["w6"].shape[1]
    c_pad = _round_up(num_classes, 128)

    g1, be1 = _fold_bn(params["bn1_gamma"], params["bn1_beta"],
                       params["bn1_mean"], params["bn1_var"])
    g2, be2 = _fold_bn(params["bn2_gamma"], params["bn2_beta"],
                       params["bn2_mean"], params["bn2_var"])

    # Fold: y = (x @ W + b) * g + be  ==  x @ (W*g) + (b*g + be)
    w1 = params["w1"] * g1[None, :]
    b1 = params["b1"] * g1 + be1
    w2 = params["w2"] * g2[None, :]
    b2 = params["b2"] * g2 + be2

    w1 = _pad2d(w1, f_pad, 256)                       # (F_pad, 256)
    w3 = _pad2d(params["w3"], 128, 128)               # (128, 64) -> (128, 128)
    b3 = _pad1d(params["b3"], 128)
    w4 = _pad2d(params["w4"], 128, 128)               # (64, 32)  -> (128, 128)
    b4 = _pad1d(params["b4"], 128)
    w5 = _pad2d(params["w5"], 128, 128)               # (32, 32)  -> (128, 128)
    b5 = _pad1d(params["b5"], 128)
    w6 = _pad2d(params["w6"], 128, c_pad)             # (32, C)   -> (128, C_pad)
    b6 = jnp.full((c_pad,), _NEG_BIG, jnp.float32).at[:num_classes].set(
        params["b6"].astype(jnp.float32))

    weights = [w.astype(jnp.bfloat16) for w in (w1, w2, w3, w4, w5, w6)]
    biases = [b.reshape(1, -1).astype(jnp.float32)
              for b in (b1, b2, b3, b4, b5, b6)]
    return c_pad, num_classes, weights, biases


def classifier_mlp_deep_forward(x, params, *, block_rows=512, k_tile=4096,
                                out_dtype=jnp.float32, force_ktiled=False):
    """Eval-mode ClassifierMLPDeep forward via a single gridded Pallas kernel.

    x: (B, C, H, W) or already-flat (B, F) array.
    """
    batch = x.shape[0]
    x2d = x.reshape(batch, -1)                         # x.view(x.size(0), -1)
    input_size = x2d.shape[1]

    budget = _vmem_budget_bytes()
    x_tile_cap = budget // 6           # ~8 MiB on v7x, ~16 MiB on v5e/v6e

    f_pad0 = _round_up(input_size, 128)
    w1_resident_bytes = f_pad0 * 256 * 2               # bf16
    use_ktiled = force_ktiled or (w1_resident_bytes > budget // 3)

    if use_ktiled:
        tk = _round_up(min(k_tile, f_pad0), 128)
        f_pad = _round_up(f_pad0, tk)
        row_bytes = tk * 2
    else:
        tk = f_pad0
        f_pad = f_pad0
        row_bytes = f_pad * 2

    c_pad, num_classes, weights, biases = _prepare_operands(
        params, input_size, f_pad)

    # Balanced batch tiles: as large as the x-tile VMEM cap allows, split so
    # the tail tile isn't mostly padding, and >=2 tiles for large batches so
    # both v7x TensorCores get work (negligible cost on v5e/v6e).
    max_tb = max(8, min(block_rows, (x_tile_cap // row_bytes) // 8 * 8))
    n_tiles = pl.cdiv(batch, max_tb)
    if batch > 256:
        n_tiles = max(n_tiles, 2)
    tb = min(max_tb, _round_up(pl.cdiv(batch, n_tiles), 8))
    b_pad = _round_up(batch, tb)

    # Single-pass xp construction: cast to bf16 FIRST, pad only if needed.
    if x2d.dtype != jnp.bfloat16:
        x2d = x2d.astype(jnp.bfloat16)
    if b_pad != batch or f_pad != input_size:
        xp = jnp.pad(x2d, ((0, b_pad - batch), (0, f_pad - input_size)))
    else:
        xp = x2d

    operands = [xp]
    if not use_ktiled:
        grid = (b_pad // tb,)
        in_specs = [pl.BlockSpec((tb, f_pad), lambda i: (i, 0))]
        for w, b in zip(weights, biases):
            operands.append(w)
            in_specs.append(pl.BlockSpec(w.shape, lambda i: (0, 0)))   # resident
            operands.append(b)
            in_specs.append(pl.BlockSpec(b.shape, lambda i: (0, 0)))   # resident
        out_specs = pl.BlockSpec((tb, c_pad), lambda i: (i, 0))
        scratch_shapes = ()
        kernel = _mlp_kernel_resident
        dim_sem = ("parallel",)
        weight_bytes = sum(int(a.size) * a.dtype.itemsize for a in operands[1:])
        need = (weight_bytes
                + 2 * tb * f_pad * 2        # double-buffered x tiles
                + 2 * tb * c_pad * 4        # double-buffered out tiles
                + 8 * tb * 256 * 4)         # intermediate activations
    else:
        grid = (b_pad // tb, f_pad // tk)
        in_specs = [pl.BlockSpec((tb, tk), lambda i, k: (i, k)),        # x streamed
                    pl.BlockSpec((tk, 256), lambda i, k: (k, 0)),       # w1 streamed
                    pl.BlockSpec(biases[0].shape, lambda i, k: (0, 0))]
        operands.append(weights[0])
        operands.append(biases[0])
        for w, b in zip(weights[1:], biases[1:]):
            operands.append(w)
            in_specs.append(pl.BlockSpec(w.shape, lambda i, k: (0, 0)))  # resident
            operands.append(b)
            in_specs.append(pl.BlockSpec(b.shape, lambda i, k: (0, 0)))  # resident
        out_specs = pl.BlockSpec((tb, c_pad), lambda i, k: (i, 0))
        scratch_shapes = [pltpu.VMEM((tb, 256), jnp.float32)]            # layer-1 acc
        kernel = _mlp_kernel_ktiled
        dim_sem = ("parallel", "arbitrary")
        resident_bytes = sum(int(a.size) * a.dtype.itemsize for a in operands[2:])
        need = (resident_bytes
                + 2 * tb * tk * 2           # x tiles
                + 2 * tk * 256 * 2          # w1 tiles
                + 2 * tb * c_pad * 4        # out tiles
                + tb * 256 * 4              # accumulator scratch
                + 8 * tb * 256 * 4)         # intermediate activations

    vmem_limit = int(min(budget, max(32 << 20, need + (8 << 20))))

    out = pl.pallas_call(
        kernel,
        out_shape=jax.ShapeDtypeStruct((b_pad, c_pad), out_dtype),
        grid=grid,
        in_specs=in_specs,
        out_specs=out_specs,
        scratch_shapes=scratch_shapes,
        compiler_params=pltpu.CompilerParams(
            dimension_semantics=dim_sem,
            vmem_limit_bytes=vmem_limit,
        ),
    )(*operands)

    # TODO(synk): a consumer that accepts the padded (b_pad, c_pad) slab would
    # save one more full-output HBM round trip; sliced here for exact module
    # output shape.
    return out[:batch, :num_classes]


# ----------------------------------------------------------------------------
# Parameters (synthetic, matching the PyTorch module's shapes).
# Linear weights stored as (in_features, out_features) so kernel does x @ W + b.
# ----------------------------------------------------------------------------
def init_params(key, input_size, num_classes=10):
    dims = [input_size, 256, 128, 64, 32, 32, num_classes]
    params = {}
    keys = jax.random.split(key, 2 * (len(dims) - 1) + 8)
    k = 0
    for i in range(len(dims) - 1):
        fan_in = dims[i]
        scale = 1.0 / jnp.sqrt(jnp.float32(fan_in))
        params[f"w{i+1}"] = (
            jax.random.uniform(keys[k], (dims[i], dims[i + 1]),
                               minval=-1.0, maxval=1.0, dtype=jnp.float32) * scale)
        k += 1
        params[f"b{i+1}"] = (
            jax.random.uniform(keys[k], (dims[i + 1],),
                               minval=-1.0, maxval=1.0, dtype=jnp.float32) * scale)
        k += 1

    # BatchNorm1d(256) / BatchNorm1d(128): running stats + affine params.
    for name, d in (("bn1", 256), ("bn2", 128)):
        params[f"{name}_gamma"] = 1.0 + 0.1 * jax.random.normal(keys[k], (d,), jnp.float32); k += 1
        params[f"{name}_beta"] = 0.1 * jax.random.normal(keys[k], (d,), jnp.float32); k += 1
        params[f"{name}_mean"] = 0.05 * jax.random.normal(keys[k], (d,), jnp.float32); k += 1
        params[f"{name}_var"] = jnp.abs(
            1.0 + 0.1 * jax.random.normal(keys[k], (d,), jnp.float32)); k += 1
    return params


# ----------------------------------------------------------------------------
# References for validation.
# ----------------------------------------------------------------------------
def _reference_forward_f32(x, params):
    """Pure f32 eval-mode forward (true module semantics, no bf16)."""
    b = x.shape[0]
    h = x.reshape(b, -1).astype(jnp.float32)

    def lrelu(v):
        return jnp.where(v > 0, v, 0.1 * v)

    def bn(v, name, eps=1e-5):
        g = params[f"{name}_gamma"] / jnp.sqrt(params[f"{name}_var"] + eps)
        return v * g + (params[f"{name}_beta"] - params[f"{name}_mean"] * g)

    h = lrelu(bn(h @ params["w1"] + params["b1"], "bn1"))
    h = lrelu(bn(h @ params["w2"] + params["b2"], "bn2"))
    h = lrelu(h @ params["w3"] + params["b3"])
    h = lrelu(h @ params["w4"] + params["b4"])
    h = lrelu(h @ params["w5"] + params["b5"])
    return jax.nn.log_softmax(h @ params["w6"] + params["b6"], axis=1)


def _reference_from_operands(xp_bf16, weights, biases, batch, num_classes):
    """Plain-JAX forward using the exact same folded/padded bf16 operands the
    kernel sees (tight-tolerance check of the kernel itself)."""
    h = xp_bf16
    for w, b in zip(weights[:5], biases[:5]):
        z = jnp.dot(h.astype(jnp.bfloat16), w,
                    preferred_element_type=jnp.float32) + b
        h = jnp.where(z > 0, z, 0.1 * z)
    logits = jnp.dot(h.astype(jnp.bfloat16), weights[5],
                     preferred_element_type=jnp.float32) + biases[5]
    return jax.nn.log_softmax(logits, axis=-1)[:batch, :num_classes]


if __name__ == "__main__":
    key = jax.random.PRNGKey(0)
    kx, kp = jax.random.split(key)

    # Small input consistent with x.view(B, -1): (2, 4, 16, 16) -> F = 1024
    B, C, H, W = 2, 4, 16, 16
    input_size = C * H * W
    num_classes = 10

    x = jax.random.normal(kx, (B, C, H, W), dtype=jnp.float32)
    params = init_params(kp, input_size, num_classes)

    # Resident-weights path (the common case).
    out = classifier_mlp_deep_forward(x, params)
    out = jax.block_until_ready(out)
    assert out.shape == (B, num_classes), out.shape

    # Also exercise the K-tiled (streamed w1) path on the same small problem
    # (4 K-steps with k_tile=256).
    out_kt = classifier_mlp_deep_forward(x, params, force_ktiled=True, k_tile=256)
    out_kt = jax.block_until_ready(out_kt)
    assert out_kt.shape == (B, num_classes), out_kt.shape

    # Tight check against a bf16-matched reference (same folded/padded operands).
    f_pad = _round_up(input_size, 128)
    c_pad, nc, weights, biases = _prepare_operands(params, input_size, f_pad)
    xp = jnp.pad(x.reshape(B, -1).astype(jnp.bfloat16),
                 ((0, _round_up(B, 8) - B), (0, f_pad - input_size)))
    ref_matched = _reference_from_operands(xp, weights, biases, B, nc)
    err_res = float(jnp.max(jnp.abs(out - ref_matched)))
    assert jnp.allclose(out, ref_matched, atol=3e-3, rtol=1e-3), err_res
    err_kt = float(jnp.max(jnp.abs(out_kt - ref_matched)))
    assert jnp.allclose(out_kt, ref_matched, atol=3e-3, rtol=1e-3), err_kt

    # Loose sanity check against the pure-f32 module semantics
    # (difference is the intended bf16 matmul quantization).
    ref_f32 = _reference_forward_f32(x, params)
    assert jnp.allclose(out, ref_f32, atol=1e-1, rtol=1e-1), (
        float(jnp.max(jnp.abs(out - ref_f32))))

    print("KERNEL_OK")
</pallas_src>

<mosaic_0001>
module attributes {stable_mosaic.version = 11 : i64} {
  func.func @_mlp_kernel_resident(%arg0: i32, %arg1: memref<8x1024xbf16, #tpu.memory_space<vmem>>, %arg2: memref<1024x256xbf16, #tpu.memory_space<vmem>>, %arg3: memref<1x256xf32, #tpu.memory_space<vmem>>, %arg4: memref<256x128xbf16, #tpu.memory_space<vmem>>, %arg5: memref<1x128xf32, #tpu.memory_space<vmem>>, %arg6: memref<128x128xbf16, #tpu.memory_space<vmem>>, %arg7: memref<1x128xf32, #tpu.memory_space<vmem>>, %arg8: memref<128x128xbf16, #tpu.memory_space<vmem>>, %arg9: memref<1x128xf32, #tpu.memory_space<vmem>>, %arg10: memref<128x128xbf16, #tpu.memory_space<vmem>>, %arg11: memref<1x128xf32, #tpu.memory_space<vmem>>, %arg12: memref<128x128xbf16, #tpu.memory_space<vmem>>, %arg13: memref<1x128xf32, #tpu.memory_space<vmem>>, %arg14: memref<8x128xf32, #tpu.memory_space<vmem>>) attributes {dimension_semantics = [#tpu.dimension_semantics<parallel>], iteration_bounds = array<i64: 1>, scalar_prefetch = 0 : i64, scratch_operands = 0 : i64, tpu.core_type = #tpu.core_type<tc>, window_params = [{transform_indices = @transform_0, window_bounds = array<i64: 8, 1024>}, {pipeline_mode = #tpu.pipeline_mode<synchronous>, transform_indices = @transform_1, window_bounds = array<i64: 1024, 256>}, {pipeline_mode = #tpu.pipeline_mode<synchronous>, transform_indices = @transform_2, window_bounds = array<i64: 1, 256>}, {pipeline_mode = #tpu.pipeline_mode<synchronous>, transform_indices = @transform_3, window_bounds = array<i64: 256, 128>}, {pipeline_mode = #tpu.pipeline_mode<synchronous>, transform_indices = @transform_4, window_bounds = array<i64: 1, 128>}, {pipeline_mode = #tpu.pipeline_mode<synchronous>, transform_indices = @transform_5, window_bounds = array<i64: 128, 128>}, {pipeline_mode = #tpu.pipeline_mode<synchronous>, transform_indices = @transform_6, window_bounds = array<i64: 1, 128>}, {pipeline_mode = #tpu.pipeline_mode<synchronous>, transform_indices = @transform_7, window_bounds = array<i64: 128, 128>}, {pipeline_mode = #tpu.pipeline_mode<synchronous>, transform_indices = @transform_8, window_bounds = array<i64: 1, 128>}, {pipeline_mode = #tpu.pipeline_mode<synchronous>, transform_indices = @transform_9, window_bounds = array<i64: 128, 128>}, {pipeline_mode = #tpu.pipeline_mode<synchronous>, transform_indices = @transform_10, window_bounds = array<i64: 1, 128>}, {pipeline_mode = #tpu.pipeline_mode<synchronous>, transform_indices = @transform_11, window_bounds = array<i64: 128, 128>}, {pipeline_mode = #tpu.pipeline_mode<synchronous>, transform_indices = @transform_12, window_bounds = array<i64: 1, 128>}, {transform_indices = @transform_13, window_bounds = array<i64: 8, 128>}]} {
    %c0 = arith.constant 0 : index
    %c0_0 = arith.constant 0 : index
    %0 = vector.load %arg1[%c0, %c0_0] : memref<8x1024xbf16, #tpu.memory_space<vmem>>, vector<8x1024xbf16>
    %c0_1 = arith.constant 0 : index
    %c0_2 = arith.constant 0 : index
    %1 = vector.load %arg2[%c0_1, %c0_2] : memref<1024x256xbf16, #tpu.memory_space<vmem>>, vector<1024x256xbf16>
    %cst = arith.constant dense<0.000000e+00> : vector<8x256xf32>
    %2 = tpu.matmul %0, %1, %cst {dimension_numbers = #tpu.dot_dimension_numbers<[1], [0], [0], [1], [0, 0, 1, 1], [], []>} : vector<8x1024xbf16>, vector<1024x256xbf16>, vector<8x256xf32> -> vector<8x256xf32>
    %c0_3 = arith.constant 0 : index
    %c0_4 = arith.constant 0 : index
    %3 = vector.load %arg3[%c0_3, %c0_4] : memref<1x256xf32, #tpu.memory_space<vmem>>, vector<1x256xf32>
    %4 = vector.broadcast %3 : vector<1x256xf32> to vector<8x256xf32>
    %5 = arith.addf %2, %4 : vector<8x256xf32>
    %cst_5 = arith.constant 1.000000e-01 : f32
    %6 = vector.broadcast %cst_5 : f32 to vector<8x256xf32>
    %7 = arith.mulf %6, %5 : vector<8x256xf32>
    %8 = arith.maximumf %5, %7 : vector<8x256xf32>
    %9 = arith.truncf %8 : vector<8x256xf32> to vector<8x256xbf16>
    %c0_6 = arith.constant 0 : index
    %c0_7 = arith.constant 0 : index
    %10 = vector.load %arg4[%c0_6, %c0_7] : memref<256x128xbf16, #tpu.memory_space<vmem>>, vector<256x128xbf16>
    %cst_8 = arith.constant dense<0.000000e+00> : vector<8x128xf32>
    %11 = tpu.matmul %9, %10, %cst_8 {dimension_numbers = #tpu.dot_dimension_numbers<[1], [0], [0], [1], [0, 0, 1, 1], [], []>} : vector<8x256xbf16>, vector<256x128xbf16>, vector<8x128xf32> -> vector<8x128xf32>
    %c0_9 = arith.constant 0 : index
    %c0_10 = arith.constant 0 : index
    %12 = vector.load %arg5[%c0_9, %c0_10] : memref<1x128xf32, #tpu.memory_space<vmem>>, vector<1x128xf32>
    %13 = vector.broadcast %12 : vector<1x128xf32> to vector<8x128xf32>
    %14 = arith.addf %11, %13 : vector<8x128xf32>
    %cst_11 = arith.constant 1.000000e-01 : f32
    %15 = vector.broadcast %cst_11 : f32 to vector<8x128xf32>
    %16 = arith.mulf %15, %14 : vector<8x128xf32>
    %17 = arith.maximumf %14, %16 : vector<8x128xf32>
    %18 = arith.truncf %17 : vector<8x128xf32> to vector<8x128xbf16>
    %c0_12 = arith.constant 0 : index
    %c0_13 = arith.constant 0 : index
    %19 = vector.load %arg6[%c0_12, %c0_13] : memref<128x128xbf16, #tpu.memory_space<vmem>>, vector<128x128xbf16>
    %cst_14 = arith.constant dense<0.000000e+00> : vector<8x128xf32>
    %20 = tpu.matmul %18, %19, %cst_14 {dimension_numbers = #tpu.dot_dimension_numbers<[1], [0], [0], [1], [0, 0, 1, 1], [], []>} : vector<8x128xbf16>, vector<128x128xbf16>, vector<8x128xf32> -> vector<8x128xf32>
    %c0_15 = arith.constant 0 : index
    %c0_16 = arith.constant 0 : index
    %21 = vector.load %arg7[%c0_15, %c0_16] : memref<1x128xf32, #tpu.memory_space<vmem>>, vector<1x128xf32>
    %22 = vector.broadcast %21 : vector<1x128xf32> to vector<8x128xf32>
    %23 = arith.addf %20, %22 : vector<8x128xf32>
    %cst_17 = arith.constant 1.000000e-01 : f32
    %24 = vector.broadcast %cst_17 : f32 to vector<8x128xf32>
    %25 = arith.mulf %24, %23 : vector<8x128xf32>
    %26 = arith.maximumf %23, %25 : vector<8x128xf32>
    %27 = arith.truncf %26 : vector<8x128xf32> to vector<8x128xbf16>
    %c0_18 = arith.constant 0 : index
    %c0_19 = arith.constant 0 : index
    %28 = vector.load %arg8[%c0_18, %c0_19] : memref<128x128xbf16, #tpu.memory_space<vmem>>, vector<128x128xbf16>
    %cst_20 = arith.constant dense<0.000000e+00> : vector<8x128xf32>
    %29 = tpu.matmul %27, %28, %cst_20 {dimension_numbers = #tpu.dot_dimension_numbers<[1], [0], [0], [1], [0, 0, 1, 1], [], []>} : vector<8x128xbf16>, vector<128x128xbf16>, vector<8x128xf32> -> vector<8x128xf32>
    %c0_21 = arith.constant 0 : index
    %c0_22 = arith.constant 0 : index
    %30 = vector.load %arg9[%c0_21, %c0_22] : memref<1x128xf32, #tpu.memory_space<vmem>>, vector<1x128xf32>
    %31 = vector.broadcast %30 : vector<1x128xf32> to vector<8x128xf32>
    %32 = arith.addf %29, %31 : vector<8x128xf32>
    %cst_23 = arith.constant 1.000000e-01 : f32
    %33 = vector.broadcast %cst_23 : f32 to vector<8x128xf32>
    %34 = arith.mulf %33, %32 : vector<8x128xf32>
    %35 = arith.maximumf %32, %34 : vector<8x128xf32>
    %36 = arith.truncf %35 : vector<8x128xf32> to vector<8x128xbf16>
    %c0_24 = arith.constant 0 : index
    %c0_25 = arith.constant 0 : index
    %37 = vector.load %arg10[%c0_24, %c0_25] : memref<128x128xbf16, #tpu.memory_space<vmem>>, vector<128x128xbf16>
    %cst_26 = arith.constant dense<0.000000e+00> : vector<8x128xf32>
    %38 = tpu.matmul %36, %37, %cst_26 {dimension_numbers = #tpu.dot_dimension_numbers<[1], [0], [0], [1], [0, 0, 1, 1], [], []>} : vector<8x128xbf16>, vector<128x128xbf16>, vector<8x128xf32> -> vector<8x128xf32>
    %c0_27 = arith.constant 0 : index
    %c0_28 = arith.constant 0 : index
    %39 = vector.load %arg11[%c0_27, %c0_28] : memref<1x128xf32, #tpu.memory_space<vmem>>, vector<1x128xf32>
    %40 = vector.broadcast %39 : vector<1x128xf32> to vector<8x128xf32>
    %41 = arith.addf %38, %40 : vector<8x128xf32>
    %cst_29 = arith.constant 1.000000e-01 : f32
    %42 = vector.broadcast %cst_29 : f32 to vector<8x128xf32>
    %43 = arith.mulf %42, %41 : vector<8x128xf32>
    %44 = arith.maximumf %41, %43 : vector<8x128xf32>
    %45 = arith.truncf %44 : vector<8x128xf32> to vector<8x128xbf16>
    %c0_30 = arith.constant 0 : index
    %c0_31 = arith.constant 0 : index
    %46 = vector.load %arg12[%c0_30, %c0_31] : memref<128x128xbf16, #tpu.memory_space<vmem>>, vector<128x128xbf16>
    %cst_32 = arith.constant dense<0.000000e+00> : vector<8x128xf32>
    %47 = tpu.matmul %45, %46, %cst_32 {dimension_numbers = #tpu.dot_dimension_numbers<[1], [0], [0], [1], [0, 0, 1, 1], [], []>} : vector<8x128xbf16>, vector<128x128xbf16>, vector<8x128xf32> -> vector<8x128xf32>
    %c0_33 = arith.constant 0 : index
    %c0_34 = arith.constant 0 : index
    %48 = vector.load %arg13[%c0_33, %c0_34] : memref<1x128xf32, #tpu.memory_space<vmem>>, vector<1x128xf32>
    %49 = vector.broadcast %48 : vector<1x128xf32> to vector<8x128xf32>
    %50 = arith.addf %47, %49 : vector<8x128xf32>
    %cst_35 = arith.constant dense<0xFF800000> : vector<8xf32>
    %51 = vector.multi_reduction <maximumf>, %50, %cst_35 [1] : vector<8x128xf32> to vector<8xf32>
    %52 = vector.shape_cast %51 : vector<8xf32> to vector<8x1xf32>
    %53 = vector.broadcast %52 : vector<8x1xf32> to vector<8x128xf32>
    %54 = arith.subf %50, %53 : vector<8x128xf32>
    %55 = math.exp %54 : vector<8x128xf32>
    %cst_36 = arith.constant dense<0.000000e+00> : vector<8xf32>
    %56 = vector.multi_reduction <add>, %55, %cst_36 [1] : vector<8x128xf32> to vector<8xf32>
    %57 = vector.shape_cast %56 : vector<8xf32> to vector<8x1xf32>
    %58 = math.log %57 : vector<8x1xf32>
    %59 = vector.broadcast %58 : vector<8x1xf32> to vector<8x128xf32>
    %60 = arith.subf %54, %59 : vector<8x128xf32>
    %c0_37 = arith.constant 0 : index
    %c0_38 = arith.constant 0 : index
    %61 = vector.load %arg14[%c0_37, %c0_38] : memref<8x128xf32, #tpu.memory_space<vmem>>, vector<8x128xf32>
    tpu.vector_store %arg14[%c0_37, %c0_38], %60 {strides = array<i32>} : memref<8x128xf32, #tpu.memory_space<vmem>>, vector<8x128xf32>,
    return
  }
  func.func @transform_0(%arg0: i32) -> (i32, i32) {
    %c0_i32 = arith.constant 0 : i32
    %c0_i32_0 = arith.constant 0 : i32
    return %arg0, %c0_i32 : i32, i32
  }
  func.func @transform_1(%arg0: i32) -> (i32, i32) {
    %c0_i32 = arith.constant 0 : i32
    %c0_i32_0 = arith.constant 0 : i32
    %c0_i32_1 = arith.constant 0 : i32
    return %c0_i32, %c0_i32_0 : i32, i32
  }
  func.func @transform_2(%arg0: i32) -> (i32, i32) {
    %c0_i32 = arith.constant 0 : i32
    %c0_i32_0 = arith.constant 0 : i32
    %c0_i32_1 = arith.constant 0 : i32
    return %c0_i32, %c0_i32_0 : i32, i32
  }
  func.func @transform_3(%arg0: i32) -> (i32, i32) {
    %c0_i32 = arith.constant 0 : i32
    %c0_i32_0 = arith.constant 0 : i32
    %c0_i32_1 = arith.constant 0 : i32
    return %c0_i32, %c0_i32_0 : i32, i32
  }
  func.func @transform_4(%arg0: i32) -> (i32, i32) {
    %c0_i32 = arith.constant 0 : i32
    %c0_i32_0 = arith.constant 0 : i32
    %c0_i32_1 = arith.constant 0 : i32
    return %c0_i32, %c0_i32_0 : i32, i32
  }
  func.func @transform_5(%arg0: i32) -> (i32, i32) {
    %c0_i32 = arith.constant 0 : i32
    %c0_i32_0 = arith.constant 0 : i32
    %c0_i32_1 = arith.constant 0 : i32
    return %c0_i32, %c0_i32_0 : i32, i32
  }
  func.func @transform_6(%arg0: i32) -> (i32, i32) {
    %c0_i32 = arith.constant 0 : i32
    %c0_i32_0 = arith.constant 0 : i32
    %c0_i32_1 = arith.constant 0 : i32
    return %c0_i32, %c0_i32_0 : i32, i32
  }
  func.func @transform_7(%arg0: i32) -> (i32, i32) {
    %c0_i32 = arith.constant 0 : i32
    %c0_i32_0 = arith.constant 0 : i32
    %c0_i32_1 = arith.constant 0 : i32
    return %c0_i32, %c0_i32_0 : i32, i32
  }
  func.func @transform_8(%arg0: i32) -> (i32, i32) {
    %c0_i32 = arith.constant 0 : i32
    %c0_i32_0 = arith.constant 0 : i32
    %c0_i32_1 = arith.constant 0 : i32
    return %c0_i32, %c0_i32_0 : i32, i32
  }
  func.func @transform_9(%arg0: i32) -> (i32, i32) {
    %c0_i32 = arith.constant 0 : i32
    %c0_i32_0 = arith.constant 0 : i32
    %c0_i32_1 = arith.constant 0 : i32
    return %c0_i32, %c0_i32_0 : i32, i32
  }
  func.func @transform_10(%arg0: i32) -> (i32, i32) {
    %c0_i32 = arith.constant 0 : i32
    %c0_i32_0 = arith.constant 0 : i32
    %c0_i32_1 = arith.constant 0 : i32
    return %c0_i32, %c0_i32_0 : i32, i32
  }
  func.func @transform_11(%arg0: i32) -> (i32, i32) {
    %c0_i32 = arith.constant 0 : i32
    %c0_i32_0 = arith.constant 0 : i32
    %c0_i32_1 = arith.constant 0 : i32
    return %c0_i32, %c0_i32_0 : i32, i32
  }
  func.func @transform_12(%arg0: i32) -> (i32, i32) {
    %c0_i32 = arith.constant 0 : i32
    %c0_i32_0 = arith.constant 0 : i32
    %c0_i32_1 = arith.constant 0 : i32
    return %c0_i32, %c0_i32_0 : i32, i32
  }
  func.func @transform_13(%arg0: i32) -> (i32, i32) {
    %c0_i32 = arith.constant 0 : i32
    %c0_i32_0 = arith.constant 0 : i32
    return %arg0, %c0_i32 : i32, i32
  }
}

</mosaic_0001>

<llo_original>
// kernel: tpu_custom_call.1
$region0: #{tpu_custom_call.1}
  #allocation0 [shape = 'u32[]', space=smem, size = 0x4, offset = 0x4, fixed_abs, tag = 'smem constant byte address 0x4 - core index']
  #allocation1 [shape = 'u32[72,128]{1,0:T(1,128)}', space=vmem, size = 0x9000, scoped, tag = 'internal scratch']
  %s0 = inlined_call_operand.hbm [shape: bf16[8,1024], index: 0, kind: input, shape index: {}]
  %s1 = inlined_call_operand.hbm [shape: bf16[1024,256], index: 1, kind: input, shape index: {}]
  %s2 = inlined_call_operand.hbm [shape: f32[1,256], index: 2, kind: input, shape index: {}]
  %s3 = inlined_call_operand.hbm [shape: bf16[256,128], index: 3, kind: input, shape index: {}]
  %s4 = inlined_call_operand.vmem [shape: f32[1,128], index: 4, kind: input, shape index: {}]
  %s5 = inlined_call_operand.hbm [shape: bf16[128,128], index: 5, kind: input, shape index: {}]
  %s6 = inlined_call_operand.vmem [shape: f32[1,128], index: 6, kind: input, shape index: {}]
  %s7 = inlined_call_operand.hbm [shape: bf16[128,128], index: 7, kind: input, shape index: {}]
  %s8 = inlined_call_operand.vmem [shape: f32[1,128], index: 8, kind: input, shape index: {}]
  %s9 = inlined_call_operand.hbm [shape: bf16[128,128], index: 9, kind: input, shape index: {}]
  %s10 = inlined_call_operand.vmem [shape: f32[1,128], index: 10, kind: input, shape index: {}]
  %s11 = inlined_call_operand.hbm [shape: bf16[128,128], index: 11, kind: input, shape index: {}]
  %s12 = inlined_call_operand.vmem [shape: f32[1,128], index: 12, kind: input, shape index: {}]
  %s13 = inlined_call_operand.hbm [shape: f32[8,128], index: 13, kind: output, shape index: {}]
  %s14 = sld [smem:[#allocation0]]
  $region94: #{tpu_custom_call.1} parent=0
    _
  %s16 = ssub.s32 1, %s14
  %s17 = scalar_select 0, %s16, %s14
  $region1: #{tpu_custom_call.1} parent=0
    #allocation2 [shape = 'u8[16384]{0}', space=vmem, size = 0x4000, scoped, tag = 'input window, operand 0, single buffered']
    #allocation3 [shape = 's32[1]{0}', space=sflag, size = 0x4, scoped, tag = 'scoped memory for tpu_custom_call.1']
    #allocation4 [shape = 's32[1]{0}', space=sflag, size = 0x4, scoped, tag = 'scoped memory for tpu_custom_call.1']
    #allocation5 [shape = 'u8[524288]{0}', space=vmem, size = 0x80000, scoped, tag = 'input window, operand 1, single buffered']
    #allocation6 [shape = 's32[1]{0}', space=sflag, size = 0x4, scoped, tag = 'scoped memory for tpu_custom_call.1']
    #allocation7 [shape = 'u8[1024]{0}', space=vmem, size = 0x400, scoped, tag = 'input window, operand 2, single buffered']
    #allocation8 [shape = 'u8[65536]{0}', space=vmem, size = 0x10000, scoped, tag = 'input window, operand 3, single buffered']
    #allocation9 [shape = 's32[1]{0}', space=sflag, size = 0x4, scoped, tag = 'scoped memory for tpu_custom_call.1']
    #allocation10 [shape = 'u8[32768]{0}', space=vmem, size = 0x8000, scoped, tag = 'input window, operand 5, single buffered']
    #allocation11 [shape = 'u8[32768]{0}', space=vmem, size = 0x8000, scoped, tag = 'input window, operand 7, single buffered']
    #allocation12 [shape = 's32[1]{0}', space=sflag, size = 0x4, scoped, tag = 'scoped memory for tpu_custom_call.1']
    #allocation13 [shape = 'u8[32768]{0}', space=vmem, size = 0x8000, scoped, tag = 'input window, operand 9, single buffered']
    #allocation14 [shape = 'u8[32768]{0}', space=vmem, size = 0x8000, scoped, tag = 'input window, operand 11, single buffered']
    #allocation15 [shape = 's32[1]{0}', space=sflag, size = 0x4, scoped, tag = 'scoped memory for tpu_custom_call.1']
    #allocation16 [shape = 'u8[4096]{0}', space=vmem, size = 0x1000, scoped, tag = 'output window, operand 0, single buffered']
    %18 = vsyncpa [#allocation3], 0
    %19 = vsyncpa [#allocation6], 0
    %20 = vsyncpa [#allocation9], 0
    %21 = vsyncpa [#allocation12], 0
    %22 = vsyncpa [#allocation15], 0
    %23 = vsyncpa [#allocation4], 0
    // Predicated region
    $region2: #{tpu_custom_call.1} parent=1 // pred_check
      _
    $region3: #{tpu_custom_call.1} parent=1 // pred_check_branch
      %25 = sbr.rel (0) target = $region5
    $region4: #{tpu_custom_call.1} parent=1 // pred_region
      %27 = vsyncadd [#allocation3], 0
      %s29 = sshll.u32 %s0, 4
      %s30 = int_to_ptr.hbm [resolvable:$true] %s29
      %s31 = sshll.u32 [#allocation2], 4
      %s32 = int_to_ptr.vmem [resolvable:$true] %s31
      %34 = dma.hbm_to_vmem [thread:$0]  %s30, 512, %s32, [#allocation3]
    $region5: #{tpu_custom_call.1} parent=1 // pred_fallthru
      _
    // Predicated region
    $region6: #{tpu_custom_call.1} parent=1 // pred_check
      _
    $region7: #{tpu_custom_call.1} parent=1 // pred_check_branch
      %36 = sbr.rel (0) target = $region9
    $region8: #{tpu_custom_call.1} parent=1 // pred_region
      %38 = vsyncadd [#allocation6], 0
      %s39 = sshll.u32 %s1, 4
      %s40 = int_to_ptr.hbm [resolvable:$true] %s39
      %s41 = sshll.u32 [#allocation5], 4
      %s42 = int_to_ptr.vmem [resolvable:$true] %s41
      %47 = dma.hbm_to_vmem [thread:$0]  %s40, 16384, %s42, [#allocation6], 128, 128, 8
    $region9: #{tpu_custom_call.1} parent=1 // pred_fallthru
      _
    // Predicated region
    $region10: #{tpu_custom_call.1} parent=1 // pred_check
      _
    $region11: #{tpu_custom_call.1} parent=1 // pred_check_branch
      %49 = sbr.rel (0) target = $region13
    $region12: #{tpu_custom_call.1} parent=1 // pred_region
      %51 = vsyncadd [#allocation6], 0
      %s53 = sshll.u32 %s2, 4
      %s54 = int_to_ptr.hbm [resolvable:$true] %s53
      %s55 = sshll.u32 [#allocation7], 4
      %s56 = int_to_ptr.vmem [resolvable:$true] %s55
      %58 = dma.hbm_to_vmem [thread:$0]  %s54, 32, %s56, [#allocation6]
    $region13: #{tpu_custom_call.1} parent=1 // pred_fallthru
      _
    // Predicated region
    $region14: #{tpu_custom_call.1} parent=1 // pred_check
      _
    $region15: #{tpu_custom_call.1} parent=1 // pred_check_branch
      %60 = sbr.rel (0) target = $region17
    $region16: #{tpu_custom_call.1} parent=1 // pred_region
      %62 = vsyncadd [#allocation9], 0
      %s63 = sshll.u32 %s3, 4
      %s64 = int_to_ptr.hbm [resolvable:$true] %s63
      %s65 = sshll.u32 [#allocation8], 4
      %s66 = int_to_ptr.vmem [resolvable:$true] %s65
      %71 = dma.hbm_to_vmem [thread:$0]  %s64, 2048, %s66, [#allocation9], 64, 64, 4
    $region17: #{tpu_custom_call.1} parent=1 // pred_fallthru
      _
    // Predicated region
    $region18: #{tpu_custom_call.1} parent=1 // pred_check
      _
    $region19: #{tpu_custom_call.1} parent=1 // pred_check_branch
      %73 = sbr.rel (0) target = $region21
    $region20: #{tpu_custom_call.1} parent=1 // pred_region
      _
    $region21: #{tpu_custom_call.1} parent=1 // pred_fallthru
      _
    // Predicated region
    $region22: #{tpu_custom_call.1} parent=1 // pred_check
      _
    $region23: #{tpu_custom_call.1} parent=1 // pred_check_branch
      %75 = sbr.rel (0) target = $region25
    $region24: #{tpu_custom_call.1} parent=1 // pred_region
      %77 = vsyncadd [#allocation9], 0
      %s78 = sshll.u32 %s5, 4
      %s79 = int_to_ptr.hbm [resolvable:$true] %s78
      %s80 = sshll.u32 [#allocation10], 4
      %s81 = int_to_ptr.vmem [resolvable:$true] %s80
      %86 = dma.hbm_to_vmem [thread:$0]  %s79, 1024, %s81, [#allocation9], 64, 64, 4
    $region25: #{tpu_custom_call.1} parent=1 // pred_fallthru
      _
    // Predicated region
    $region26: #{tpu_custom_call.1} parent=1 // pred_check
      _
    $region27: #{tpu_custom_call.1} parent=1 // pred_check_branch
      %88 = sbr.rel (0) target = $region29
    $region28: #{tpu_custom_call.1} parent=1 // pred_region
      _
    $region29: #{tpu_custom_call.1} parent=1 // pred_fallthru
      _
    // Predicated region
    $region30: #{tpu_custom_call.1} parent=1 // pred_check
      _
    $region31: #{tpu_custom_call.1} parent=1 // pred_check_branch
      %90 = sbr.rel (0) target = $region33
    $region32: #{tpu_custom_call.1} parent=1 // pred_region
      %92 = vsyncadd [#allocation12], 0
      %s93 = sshll.u32 %s7, 4
      %s94 = int_to_ptr.hbm [resolvable:$true] %s93
      %s95 = sshll.u32 [#allocation11], 4
      %s96 = int_to_ptr.vmem [resolvable:$true] %s95
      %101 = dma.hbm_to_vmem [thread:$0]  %s94, 1024, %s96, [#allocation12], 64, 64, 4
    $region33: #{tpu_custom_call.1} parent=1 // pred_fallthru
      _
    // Predicated region
    $region34: #{tpu_custom_call.1} parent=1 // pred_check
      _
    $region35: #{tpu_custom_call.1} parent=1 // pred_check_branch
      %103 = sbr.rel (0) target = $region37
    $region36: #{tpu_custom_call.1} parent=1 // pred_region
      _
    $region37: #{tpu_custom_call.1} parent=1 // pred_fallthru
      _
    // Predicated region
    $region38: #{tpu_custom_call.1} parent=1 // pred_check
      _
    $region39: #{tpu_custom_call.1} parent=1 // pred_check_branch
      %105 = sbr.rel (0) target = $region41
    $region40: #{tpu_custom_call.1} parent=1 // pred_region
      %107 = vsyncadd [#allocation12], 0
      %s108 = sshll.u32 %s9, 4
      %s109 = int_to_ptr.hbm [resolvable:$true] %s108
      %s110 = sshll.u32 [#allocation13], 4
      %s111 = int_to_ptr.vmem [resolvable:$true] %s110
      %116 = dma.hbm_to_vmem [thread:$0]  %s109, 1024, %s111, [#allocation12], 64, 64, 4
    $region41: #{tpu_custom_call.1} parent=1 // pred_fallthru
      _
    // Predicated region
    $region42: #{tpu_custom_call.1} parent=1 // pred_check
      _
    $region43: #{tpu_custom_call.1} parent=1 // pred_check_branch
      %118 = sbr.rel (0) target = $region45
    $region44: #{tpu_custom_call.1} parent=1 // pred_region
      _
    $region45: #{tpu_custom_call.1} parent=1 // pred_fallthru
      _
    // Predicated region
    $region46: #{tpu_custom_call.1} parent=1 // pred_check
      _
    $region47: #{tpu_custom_call.1} parent=1 // pred_check_branch
      %120 = sbr.rel (0) target = $region49
    $region48: #{tpu_custom_call.1} parent=1 // pred_region
      %122 = vsyncadd [#allocation15], 0
      %s123 = sshll.u32 %s11, 4
      %s124 = int_to_ptr.hbm [resolvable:$true] %s123
      %s125 = sshll.u32 [#allocation14], 4
      %s126 = int_to_ptr.vmem [resolvable:$true] %s125
      %131 = dma.hbm_to_vmem [thread:$0]  %s124, 1024, %s126, [#allocation15], 64, 64, 4
    $region49: #{tpu_custom_call.1} parent=1 // pred_fallthru
      _
    // Predicated region
    $region50: #{tpu_custom_call.1} parent=1 // pred_check
      _
    $region51: #{tpu_custom_call.1} parent=1 // pred_check_branch
      %133 = sbr.rel (0) target = $region53
    $region52: #{tpu_custom_call.1} parent=1 // pred_region
      _
    $region53: #{tpu_custom_call.1} parent=1 // pred_fallthru
      _
    // Predicated region
    $region54: #{tpu_custom_call.1} parent=1 // pred_check
      _
    $region55: #{tpu_custom_call.1} parent=1 // pred_check_branch
      %135 = sbr.rel (0) target = $region57
    $region56: #{tpu_custom_call.1} parent=1 // pred_region
      %137 = dma.done [#allocation3], 512
    $region57: #{tpu_custom_call.1} parent=1 // pred_fallthru
      _
    // Predicated region
    $region58: #{tpu_custom_call.1} parent=1 // pred_check
      _
    $region59: #{tpu_custom_call.1} parent=1 // pred_check_branch
      %139 = sbr.rel (0) target = $region61
    $region60: #{tpu_custom_call.1} parent=1 // pred_region
      %141 = dma.done [#allocation6], 16384
    $region61: #{tpu_custom_call.1} parent=1 // pred_fallthru
      _
    // Predicated region
    $region62: #{tpu_custom_call.1} parent=1 // pred_check
      _
    $region63: #{tpu_custom_call.1} parent=1 // pred_check_branch
      %143 = sbr.rel (0) target = $region65
    $region64: #{tpu_custom_call.1} parent=1 // pred_region
      %145 = dma.done [#allocation6], 32
    $region65: #{tpu_custom_call.1} parent=1 // pred_fallthru
      _
    // Predicated region
    $region66: #{tpu_custom_call.1} parent=1 // pred_check
      _
    $region67: #{tpu_custom_call.1} parent=1 // pred_check_branch
      %147 = sbr.rel (0) target = $region69
    $region68: #{tpu_custom_call.1} parent=1 // pred_region
      %149 = dma.done [#allocation9], 2048
    $region69: #{tpu_custom_call.1} parent=1 // pred_fallthru
      _
    // Predicated region
    $region70: #{tpu_custom_call.1} parent=1 // pred_check
      _
    $region71: #{tpu_custom_call.1} parent=1 // pred_check_branch
      %151 = sbr.rel (0) target = $region73
    $region72: #{tpu_custom_call.1} parent=1 // pred_region
      %153 = dma.done [#allocation9], 1024
    $region73: #{tpu_custom_call.1} parent=1 // pred_fallthru
      _
    // Predicated region
    $region74: #{tpu_custom_call.1} parent=1 // pred_check
      _
    $region75: #{tpu_custom_call.1} parent=1 // pred_check_branch
      %155 = sbr.rel (0) target = $region77
    $region76: #{tpu_custom_call.1} parent=1 // pred_region
      %157 = dma.done [#allocation12], 1024
    $region77: #{tpu_custom_call.1} parent=1 // pred_fallthru
      _
    // Predicated region
    $region78: #{tpu_custom_call.1} parent=1 // pred_check
      _
    $region79: #{tpu_custom_call.1} parent=1 // pred_check_branch
      %159 = sbr.rel (0) target = $region81
    $region80: #{tpu_custom_call.1} parent=1 // pred_region
      %161 = dma.done [#allocation12], 1024
    $region81: #{tpu_custom_call.1} parent=1 // pred_fallthru
      _
    // Predicated region
    $region82: #{tpu_custom_call.1} parent=1 // pred_check
      _
    $region83: #{tpu_custom_call.1} parent=1 // pred_check_branch
      %163 = sbr.rel (0) target = $region85
    $region84: #{tpu_custom_call.1} parent=1 // pred_region
      %165 = dma.done [#allocation15], 1024
    $region85: #{tpu_custom_call.1} parent=1 // pred_fallthru
      _
    %v166 = vld [vmem:[#allocation2] sm:$0xff]
    %v167 = vld [vmem:[#allocation2 + $0x8] sm:$0xff]
    %v168 = vld [vmem:[#allocation2 + $0x10] sm:$0xff]
    %v169 = vld [vmem:[#allocation2 + $0x18] sm:$0xff]
    %v170 = vld [vmem:[#allocation5] sm:$0xff]
    %v171 = vld [vmem:[#allocation5 + $0x8] sm:$0xff]
    %v172 = vld [vmem:[#allocation5 + $0x10] sm:$0xff]
    %v173 = vld [vmem:[#allocation5 + $0x18] sm:$0xff]
    %v174 = vld [vmem:[#allocation5 + $0x20] sm:$0xff]
    %v175 = vld [vmem:[#allocation5 + $0x28] sm:$0xff]
    %v176 = vld [vmem:[#allocation5 + $0x30] sm:$0xff]
    %v177 = vld [vmem:[#allocation5 + $0x38] sm:$0xff]
    %v178 = vld [vmem:[#allocation5 + $0x40] sm:$0xff]
    %v179 = vld [vmem:[#allocation5 + $0x48] sm:$0xff]
    %v180 = vld [vmem:[#allocation5 + $0x50] sm:$0xff]
    %v181 = vld [vmem:[#allocation5 + $0x58] sm:$0xff]
    %v182 = vld [vmem:[#allocation5 + $0x60] sm:$0xff]
    %v183 = vld [vmem:[#allocation5 + $0x68] sm:$0xff]
    %v184 = vld [vmem:[#allocation5 + $0x70] sm:$0xff]
    %v185 = vld [vmem:[#allocation5 + $0x78] sm:$0xff]
    %v186 = vld [vmem:[#allocation5 + $0x80] sm:$0xff]
    %v187 = vld [vmem:[#allocation5 + $0x88] sm:$0xff]
    %v188 = vld [vmem:[#allocation5 + $0x90] sm:$0xff]
    %v189 = vld [vmem:[#allocation5 + $0x98] sm:$0xff]
    %v190 = vld [vmem:[#allocation5 + $0xa0] sm:$0xff]
    %v191 = vld [vmem:[#allocation5 + $0xa8] sm:$0xff]
    %v192 = vld [vmem:[#allocation5 + $0xb0] sm:$0xff]
    %v193 = vld [vmem:[#allocation5 + $0xb8] sm:$0xff]
    %v194 = vld [vmem:[#allocation5 + $0xc0] sm:$0xff]
    %v195 = vld [vmem:[#allocation5 + $0xc8] sm:$0xff]
    %v196 = vld [vmem:[#allocation5 + $0xd0] sm:$0xff]
    %v197 = vld [vmem:[#allocation5 + $0xd8] sm:$0xff]
    %v198 = vld [vmem:[#allocation5 + $0xe0] sm:$0xff]
    %v199 = vld [vmem:[#allocation5 + $0xe8] sm:$0xff]
    %v200 = vld [vmem:[#allocation5 + $0xf0] sm:$0xff]
    %v201 = vld [vmem:[#allocation5 + $0xf8] sm:$0xff]
    %v202 = vld [vmem:[#allocation5 + $0x100] sm:$0xff]
    %v203 = vld [vmem:[#allocation5 + $0x108] sm:$0xff]
    %v204 = vld [vmem:[#allocation5 + $0x110] sm:$0xff]
    %v205 = vld [vmem:[#allocation5 + $0x118] sm:$0xff]
    %v206 = vld [vmem:[#allocation5 + $0x120] sm:$0xff]
    %v207 = vld [vmem:[#allocation5 + $0x128] sm:$0xff]
    %v208 = vld [vmem:[#allocation5 + $0x130] sm:$0xff]
    %v209 = vld [vmem:[#allocation5 + $0x138] sm:$0xff]
    %v210 = vld [vmem:[#allocation5 + $0x140] sm:$0xff]
    %v211 = vld [vmem:[#allocation5 + $0x148] sm:$0xff]
    %v212 = vld [vmem:[#allocation5 + $0x150] sm:$0xff]
    %v213 = vld [vmem:[#allocation5 + $0x158] sm:$0xff]
    %v214 = vld [vmem:[#allocation5 + $0x160] sm:$0xff]
    %v215 = vld [vmem:[#allocation5 + $0x168] sm:$0xff]
    %v216 = vld [vmem:[#allocation5 + $0x170] sm:$0xff]
    %v217 = vld [vmem:[#allocation5 + $0x178] sm:$0xff]
    %v218 = vld [vmem:[#allocation5 + $0x180] sm:$0xff]
    %v219 = vld [vmem:[#allocation5 + $0x188] sm:$0xff]
    %v220 = vld [vmem:[#allocation5 + $0x190] sm:$0xff]
    %v221 = vld [vmem:[#allocation5 + $0x198] sm:$0xff]
    %v222 = vld [vmem:[#allocation5 + $0x1a0] sm:$0xff]
    %v223 = vld [vmem:[#allocation5 + $0x1a8] sm:$0xff]
    %v224 = vld [vmem:[#allocation5 + $0x1b0] sm:$0xff]
    %v225 = vld [vmem:[#allocation5 + $0x1b8] sm:$0xff]
    %v226 = vld [vmem:[#allocation5 + $0x1c0] sm:$0xff]
    %v227 = vld [vmem:[#allocation5 + $0x1c8] sm:$0xff]
    %v228 = vld [vmem:[#allocation5 + $0x1d0] sm:$0xff]
    %v229 = vld [vmem:[#allocation5 + $0x1d8] sm:$0xff]
    %v230 = vld [vmem:[#allocation5 + $0x1e0] sm:$0xff]
    %v231 = vld [vmem:[#allocation5 + $0x1e8] sm:$0xff]
    %v232 = vld [vmem:[#allocation5 + $0x1f0] sm:$0xff]
    %v233 = vld [vmem:[#allocation5 + $0x1f8] sm:$0xff]
    %v234 = vld [vmem:[#allocation5 + $0x200] sm:$0xff]
    %v235 = vld [vmem:[#allocation5 + $0x208] sm:$0xff]
    %v236 = vld [vmem:[#allocation5 + $0x210] sm:$0xff]
    %v237 = vld [vmem:[#allocation5 + $0x218] sm:$0xff]
    %v238 = vld [vmem:[#allocation5 + $0x220] sm:$0xff]
    %v239 = vld [vmem:[#allocation5 + $0x228] sm:$0xff]
    %v240 = vld [vmem:[#allocation5 + $0x230] sm:$0xff]
    %v241 = vld [vmem:[#allocation5 + $0x238] sm:$0xff]
    %v242 = vld [vmem:[#allocation5 + $0x240] sm:$0xff]
    %v243 = vld [vmem:[#allocation5 + $0x248] sm:$0xff]
    %v244 = vld [vmem:[#allocation5 + $0x250] sm:$0xff]
    %v245 = vld [vmem:[#allocation5 + $0x258] sm:$0xff]
    %v246 = vld [vmem:[#allocation5 + $0x260] sm:$0xff]
    %v247 = vld [vmem:[#allocation5 + $0x268] sm:$0xff]
    %v248 = vld [vmem:[#allocation5 + $0x270] sm:$0xff]
    %v249 = vld [vmem:[#allocation5 + $0x278] sm:$0xff]
    %v250 = vld [vmem:[#allocation5 + $0x280] sm:$0xff]
    %v251 = vld [vmem:[#allocation5 + $0x288] sm:$0xff]
    %v252 = vld [vmem:[#allocation5 + $0x290] sm:$0xff]
    %v253 = vld [vmem:[#allocation5 + $0x298] sm:$0xff]
    %v254 = vld [vmem:[#allocation5 + $0x2a0] sm:$0xff]
    %v255 = vld [vmem:[#allocation5 + $0x2a8] sm:$0xff]
    %v256 = vld [vmem:[#allocation5 + $0x2b0] sm:$0xff]
    %v257 = vld [vmem:[#allocation5 + $0x2b8] sm:$0xff]
    %v258 = vld [vmem:[#allocation5 + $0x2c0] sm:$0xff]
    %v259 = vld [vmem:[#allocation5 + $0x2c8] sm:$0xff]
    %v260 = vld [vmem:[#allocation5 + $0x2d0] sm:$0xff]
    %v261 = vld [vmem:[#allocation5 + $0x2d8] sm:$0xff]
    %v262 = vld [vmem:[#allocation5 + $0x2e0] sm:$0xff]
    %v263 = vld [vmem:[#allocation5 + $0x2e8] sm:$0xff]
    %v264 = vld [vmem:[#allocation5 + $0x2f0] sm:$0xff]
    %v265 = vld [vmem:[#allocation5 + $0x2f8] sm:$0xff]
    %v266 = vld [vmem:[#allocation5 + $0x300] sm:$0xff]
    %v267 = vld [vmem:[#allocation5 + $0x308] sm:$0xff]
    %v268 = vld [vmem:[#allocation5 + $0x310] sm:$0xff]
    %v269 = vld [vmem:[#allocation5 + $0x318] sm:$0xff]
    %v270 = vld [vmem:[#allocation5 + $0x320] sm:$0xff]
    %v271 = vld [vmem:[#allocation5 + $0x328] sm:$0xff]
    %v272 = vld [vmem:[#allocation5 + $0x330] sm:$0xff]
    %v273 = vld [vmem:[#allocation5 + $0x338] sm:$0xff]
    %v274 = vld [vmem:[#allocation5 + $0x340] sm:$0xff]
    %v275 = vld [vmem:[#allocation5 + $0x348] sm:$0xff]
    %v276 = vld [vmem:[#allocation5 + $0x350] sm:$0xff]
    %v277 = vld [vmem:[#allocation5 + $0x358] sm:$0xff]
    %v278 = vld [vmem:[#allocation5 + $0x360] sm:$0xff]
    %v279 = vld [vmem:[#allocation5 + $0x368] sm:$0xff]
    %v280 = vld [vmem:[#allocation5 + $0x370] sm:$0xff]
    %v281 = vld [vmem:[#allocation5 + $0x378] sm:$0xff]
    %v282 = vld [vmem:[#allocation5 + $0x380] sm:$0xff]
    %v283 = vld [vmem:[#allocation5 + $0x388] sm:$0xff]
    %v284 = vld [vmem:[#allocation5 + $0x390] sm:$0xff]
    %v285 = vld [vmem:[#allocation5 + $0x398] sm:$0xff]
    %v286 = vld [vmem:[#allocation5 + $0x3a0] sm:$0xff]
    %v287 = vld [vmem:[#allocation5 + $0x3a8] sm:$0xff]
    %v288 = vld [vmem:[#allocation5 + $0x3b0] sm:$0xff]
    %v289 = vld [vmem:[#allocation5 + $0x3b8] sm:$0xff]
    %v290 = vld [vmem:[#allocation5 + $0x3c0] sm:$0xff]
    %v291 = vld [vmem:[#allocation5 + $0x3c8] sm:$0xff]
    %v292 = vld [vmem:[#allocation5 + $0x3d0] sm:$0xff]
    %v293 = vld [vmem:[#allocation5 + $0x3d8] sm:$0xff]
    %v294 = vld [vmem:[#allocation5 + $0x3e0] sm:$0xff]
    %v295 = vld [vmem:[#allocation5 + $0x3e8] sm:$0xff]
    %v296 = vld [vmem:[#allocation5 + $0x3f0] sm:$0xff]
    %v297 = vld [vmem:[#allocation5 + $0x3f8] sm:$0xff]
    %v298 = vld [vmem:[#allocation7] sm:$0x3]
    %v300 = vperm.slane %v298, 0
    %v301 = vperm.slane %v298, 1
    %v308 = vunpack.c.l.b16 %v166
    %v309 = vunpack.c.h.b16 %v166
    %v310 = vunpack.c.l.b16 %v167
    %v311 = vunpack.c.h.b16 %v167
    %v312 = vunpack.c.l.b16 %v168
    %v313 = vunpack.c.h.b16 %v168
    %v314 = vunpack.c.l.b16 %v169
    %v315 = vunpack.c.h.b16 %v169
    %v316 = vpack.c.b16 %v308, %v308
    %v317 = vpack.c.b16 %v309, %v309
    %v318 = vpack.c.b16 %v310, %v310
    %v319 = vpack.c.b16 %v311, %v311
    %v320 = vpack.c.b16 %v312, %v312
    %v321 = vpack.c.b16 %v313, %v313
    %v322 = vpack.c.b16 %v314, %v314
    %v323 = vpack.c.b16 %v315, %v315
    %v460 = vunpack.c.l.b16 %v170
    %v461 = vunpack.c.h.b16 %v170
    %v462 = vunpack.c.l.b16 %v171
    %v463 = vunpack.c.h.b16 %v171
    %v464 = vunpack.c.l.b16 %v172
    %v465 = vunpack.c.h.b16 %v172
    %v466 = vunpack.c.l.b16 %v173
    %v467 = vunpack.c.h.b16 %v173
    %v468 = vunpack.c.l.b16 %v174
    %v469 = vunpack.c.h.b16 %v174
    %v470 = vunpack.c.l.b16 %v175
    %v471 = vunpack.c.h.b16 %v175
    %v472 = vunpack.c.l.b16 %v176
    %v473 = vunpack.c.h.b16 %v176
    %v474 = vunpack.c.l.b16 %v177
    %v475 = vunpack.c.h.b16 %v177
    %v476 = vunpack.c.l.b16 %v178
    %v477 = vunpack.c.h.b16 %v178
    %v478 = vunpack.c.l.b16 %v179
    %v479 = vunpack.c.h.b16 %v179
    %v480 = vunpack.c.l.b16 %v180
    %v481 = vunpack.c.h.b16 %v180
    %v482 = vunpack.c.l.b16 %v181
    %v483 = vunpack.c.h.b16 %v181
    %v484 = vunpack.c.l.b16 %v182
    %v485 = vunpack.c.h.b16 %v182
    %v486 = vunpack.c.l.b16 %v183
    %v487 = vunpack.c.h.b16 %v183
    %v488 = vunpack.c.l.b16 %v184
    %v489 = vunpack.c.h.b16 %v184
    %v490 = vunpack.c.l.b16 %v185
    %v491 = vunpack.c.h.b16 %v185
    %v492 = vunpack.c.l.b16 %v186
    %v493 = vunpack.c.h.b16 %v186
    %v494 = vunpack.c.l.b16 %v187
    %v495 = vunpack.c.h.b16 %v187
    %v496 = vunpack.c.l.b16 %v188
    %v497 = vunpack.c.h.b16 %v188
    %v498 = vunpack.c.l.b16 %v189
    %v499 = vunpack.c.h.b16 %v189
    %v500 = vunpack.c.l.b16 %v190
    %v501 = vunpack.c.h.b16 %v190
    %v502 = vunpack.c.l.b16 %v191
    %v503 = vunpack.c.h.b16 %v191
    %v504 = vunpack.c.l.b16 %v192
    %v505 = vunpack.c.h.b16 %v192
    %v506 = vunpack.c.l.b16 %v193
    %v507 = vunpack.c.h.b16 %v193
    %v508 = vunpack.c.l.b16 %v194
    %v509 = vunpack.c.h.b16 %v194
    %v510 = vunpack.c.l.b16 %v195
    %v511 = vunpack.c.h.b16 %v195
    %v512 = vunpack.c.l.b16 %v196
    %v513 = vunpack.c.h.b16 %v196
    %v514 = vunpack.c.l.b16 %v197
    %v515 = vunpack.c.h.b16 %v197
    %v516 = vunpack.c.l.b16 %v198
    %v517 = vunpack.c.h.b16 %v198
    %v518 = vunpack.c.l.b16 %v199
    %v519 = vunpack.c.h.b16 %v199
    %v520 = vunpack.c.l.b16 %v200
    %v521 = vunpack.c.h.b16 %v200
    %v522 = vunpack.c.l.b16 %v201
    %v523 = vunpack.c.h.b16 %v201
    %v524 = vunpack.c.l.b16 %v202
    %v525 = vunpack.c.h.b16 %v202
    %v526 = vunpack.c.l.b16 %v203
    %v527 = vunpack.c.h.b16 %v203
    %v528 = vunpack.c.l.b16 %v204
    %v529 = vunpack.c.h.b16 %v204
    %v530 = vunpack.c.l.b16 %v205
    %v531 = vunpack.c.h.b16 %v205
    %v532 = vunpack.c.l.b16 %v206
    %v533 = vunpack.c.h.b16 %v206
    %v534 = vunpack.c.l.b16 %v207
    %v535 = vunpack.c.h.b16 %v207
    %v536 = vunpack.c.l.b16 %v208
    %v537 = vunpack.c.h.b16 %v208
    %v538 = vunpack.c.l.b16 %v209
    %v539 = vunpack.c.h.b16 %v209
    %v540 = vunpack.c.l.b16 %v210
    %v541 = vunpack.c.h.b16 %v210
    %v542 = vunpack.c.l.b16 %v211
    %v543 = vunpack.c.h.b16 %v211
    %v544 = vunpack.c.l.b16 %v212
    %v545 = vunpack.c.h.b16 %v212
    %v546 = vunpack.c.l.b16 %v213
    %v547 = vunpack.c.h.b16 %v213
    %v548 = vunpack.c.l.b16 %v214
    %v549 = vunpack.c.h.b16 %v214
    %v550 = vunpack.c.l.b16 %v215
    %v551 = vunpack.c.h.b16 %v215
    %v552 = vunpack.c.l.b16 %v216
    %v553 = vunpack.c.h.b16 %v216
    %v554 = vunpack.c.l.b16 %v217
    %v555 = vunpack.c.h.b16 %v217
    %v556 = vunpack.c.l.b16 %v218
    %v557 = vunpack.c.h.b16 %v218
    %v558 = vunpack.c.l.b16 %v219
    %v559 = vunpack.c.h.b16 %v219
    %v560 = vunpack.c.l.b16 %v220
    %v561 = vunpack.c.h.b16 %v220
    %v562 = vunpack.c.l.b16 %v221
    %v563 = vunpack.c.h.b16 %v221
    %v564 = vunpack.c.l.b16 %v222
    %v565 = vunpack.c.h.b16 %v222
    %v566 = vunpack.c.l.b16 %v223
    %v567 = vunpack.c.h.b16 %v223
    %v568 = vunpack.c.l.b16 %v224
    %v569 = vunpack.c.h.b16 %v224
    %v570 = vunpack.c.l.b16 %v225
    %v571 = vunpack.c.h.b16 %v225
    %v572 = vunpack.c.l.b16 %v226
    %v573 = vunpack.c.h.b16 %v226
    %v574 = vunpack.c.l.b16 %v227
    %v575 = vunpack.c.h.b16 %v227
    %v576 = vunpack.c.l.b16 %v228
    %v577 = vunpack.c.h.b16 %v228
    %v578 = vunpack.c.l.b16 %v229
    %v579 = vunpack.c.h.b16 %v229
    %v580 = vunpack.c.l.b16 %v230
    %v581 = vunpack.c.h.b16 %v230
    %v582 = vunpack.c.l.b16 %v231
    %v583 = vunpack.c.h.b16 %v231
    %v584 = vunpack.c.l.b16 %v232
    %v585 = vunpack.c.h.b16 %v232
    %v586 = vunpack.c.l.b16 %v233
    %v587 = vunpack.c.h.b16 %v233
    %v588 = vunpack.c.l.b16 %v234
    %v589 = vunpack.c.h.b16 %v234
    %v590 = vunpack.c.l.b16 %v235
    %v591 = vunpack.c.h.b16 %v235
    %v592 = vunpack.c.l.b16 %v236
    %v593 = vunpack.c.h.b16 %v236
    %v594 = vunpack.c.l.b16 %v237
    %v595 = vunpack.c.h.b16 %v237
    %v596 = vunpack.c.l.b16 %v238
    %v597 = vunpack.c.h.b16 %v238
    %v598 = vunpack.c.l.b16 %v239
    %v599 = vunpack.c.h.b16 %v239
    %v600 = vunpack.c.l.b16 %v240
    %v601 = vunpack.c.h.b16 %v240
    %v602 = vunpack.c.l.b16 %v241
    %v603 = vunpack.c.h.b16 %v241
    %v604 = vunpack.c.l.b16 %v242
    %v605 = vunpack.c.h.b16 %v242
    %v606 = vunpack.c.l.b16 %v243
    %v607 = vunpack.c.h.b16 %v243
    %v608 = vunpack.c.l.b16 %v244
    %v609 = vunpack.c.h.b16 %v244
    %v610 = vunpack.c.l.b16 %v245
    %v611 = vunpack.c.h.b16 %v245
    %v612 = vunpack.c.l.b16 %v246
    %v613 = vunpack.c.h.b16 %v246
    %v614 = vunpack.c.l.b16 %v247
    %v615 = vunpack.c.h.b16 %v247
    %v616 = vunpack.c.l.b16 %v248
    %v617 = vunpack.c.h.b16 %v248
    %v618 = vunpack.c.l.b16 %v249
    %v619 = vunpack.c.h.b16 %v249
    %v620 = vunpack.c.l.b16 %v250
    %v621 = vunpack.c.h.b16 %v250
    %v622 = vunpack.c.l.b16 %v251
    %v623 = vunpack.c.h.b16 %v251
    %v624 = vunpack.c.l.b16 %v252
    %v625 = vunpack.c.h.b16 %v252
    %v626 = vunpack.c.l.b16 %v253
    %v627 = vunpack.c.h.b16 %v253
    %v628 = vunpack.c.l.b16 %v254
    %v629 = vunpack.c.h.b16 %v254
    %v630 = vunpack.c.l.b16 %v255
    %v631 = vunpack.c.h.b16 %v255
    %v632 = vunpack.c.l.b16 %v256
    %v633 = vunpack.c.h.b16 %v256
    %v634 = vunpack.c.l.b16 %v257
    %v635 = vunpack.c.h.b16 %v257
    %v636 = vunpack.c.l.b16 %v258
    %v637 = vunpack.c.h.b16 %v258
    %v638 = vunpack.c.l.b16 %v259
    %v639 = vunpack.c.h.b16 %v259
    %v640 = vunpack.c.l.b16 %v260
    %v641 = vunpack.c.h.b16 %v260
    %v642 = vunpack.c.l.b16 %v261
    %v643 = vunpack.c.h.b16 %v261
    %v644 = vunpack.c.l.b16 %v262
    %v645 = vunpack.c.h.b16 %v262
    %v646 = vunpack.c.l.b16 %v263
    %v647 = vunpack.c.h.b16 %v263
    %v648 = vunpack.c.l.b16 %v264
    %v649 = vunpack.c.h.b16 %v264
    %v650 = vunpack.c.l.b16 %v265
    %v651 = vunpack.c.h.b16 %v265
    %v652 = vunpack.c.l.b16 %v266
    %v653 = vunpack.c.h.b16 %v266
    %v654 = vunpack.c.l.b16 %v267
    %v655 = vunpack.c.h.b16 %v267
    %v656 = vunpack.c.l.b16 %v268
    %v657 = vunpack.c.h.b16 %v268
    %v658 = vunpack.c.l.b16 %v269
    %v659 = vunpack.c.h.b16 %v269
    %v660 = vunpack.c.l.b16 %v270
    %v661 = vunpack.c.h.b16 %v270
    %v662 = vunpack.c.l.b16 %v271
    %v663 = vunpack.c.h.b16 %v271
    %v664 = vunpack.c.l.b16 %v272
    %v665 = vunpack.c.h.b16 %v272
    %v666 = vunpack.c.l.b16 %v273
    %v667 = vunpack.c.h.b16 %v273
    %v668 = vunpack.c.l.b16 %v274
    %v669 = vunpack.c.h.b16 %v274
    %v670 = vunpack.c.l.b16 %v275
    %v671 = vunpack.c.h.b16 %v275
    %v672 = vunpack.c.l.b16 %v276
    %v673 = vunpack.c.h.b16 %v276
    %v674 = vunpack.c.l.b16 %v277
    %v675 = vunpack.c.h.b16 %v277
    %v676 = vunpack.c.l.b16 %v278
    %v677 = vunpack.c.h.b16 %v278
    %v678 = vunpack.c.l.b16 %v279
    %v679 = vunpack.c.h.b16 %v279
    %v680 = vunpack.c.l.b16 %v280
    %v681 = vunpack.c.h.b16 %v280
    %v682 = vunpack.c.l.b16 %v281
    %v683 = vunpack.c.h.b16 %v281
    %v684 = vunpack.c.l.b16 %v282
    %v685 = vunpack.c.h.b16 %v282
    %v686 = vunpack.c.l.b16 %v283
    %v687 = vunpack.c.h.b16 %v283
    %v688 = vunpack.c.l.b16 %v284
    %v689 = vunpack.c.h.b16 %v284
    %v690 = vunpack.c.l.b16 %v285
    %v691 = vunpack.c.h.b16 %v285
    %v692 = vunpack.c.l.b16 %v286
    %v693 = vunpack.c.h.b16 %v286
    %v694 = vunpack.c.l.b16 %v287
    %v695 = vunpack.c.h.b16 %v287
    %v696 = vunpack.c.l.b16 %v288
    %v697 = vunpack.c.h.b16 %v288
    %v698 = vunpack.c.l.b16 %v289
    %v699 = vunpack.c.h.b16 %v289
    %v700 = vunpack.c.l.b16 %v290
    %v701 = vunpack.c.h.b16 %v290
    %v702 = vunpack.c.l.b16 %v291
    %v703 = vunpack.c.h.b16 %v291
    %v704 = vunpack.c.l.b16 %v292
    %v705 = vunpack.c.h.b16 %v292
    %v706 = vunpack.c.l.b16 %v293
    %v707 = vunpack.c.h.b16 %v293
    %v708 = vunpack.c.l.b16 %v294
    %v709 = vunpack.c.h.b16 %v294
    %v710 = vunpack.c.l.b16 %v295
    %v711 = vunpack.c.h.b16 %v295
    %v712 = vunpack.c.l.b16 %v296
    %v713 = vunpack.c.h.b16 %v296
    %v714 = vunpack.c.l.b16 %v297
    %v715 = vunpack.c.h.b16 %v297
    %v716 = vpack.c.b16 %v462, %v460
    %v717 = vpack.c.b16 %v463, %v461
    %v718 = vpack.c.b16 %v466, %v464
    %v719 = vpack.c.b16 %v467, %v465
    %v720 = vpack.c.b16 %v470, %v468
    %v721 = vpack.c.b16 %v471, %v469
    %v722 = vpack.c.b16 %v474, %v472
    %v723 = vpack.c.b16 %v475, %v473
    %v724 = vpack.c.b16 %v478, %v476
    %v725 = vpack.c.b16 %v479, %v477
    %v726 = vpack.c.b16 %v482, %v480
    %v727 = vpack.c.b16 %v483, %v481
    %v728 = vpack.c.b16 %v486, %v484
    %v729 = vpack.c.b16 %v487, %v485
    %v730 = vpack.c.b16 %v490, %v488
    %v731 = vpack.c.b16 %v491, %v489
    %v732 = vpack.c.b16 %v494, %v492
    %v733 = vpack.c.b16 %v495, %v493
    %v734 = vpack.c.b16 %v498, %v496
    %v735 = vpack.c.b16 %v499, %v497
    %v736 = vpack.c.b16 %v502, %v500
    %v737 = vpack.c.b16 %v503, %v501
    %v738 = vpack.c.b16 %v506, %v504
    %v739 = vpack.c.b16 %v507, %v505
    %v740 = vpack.c.b16 %v510, %v508
    %v741 = vpack.c.b16 %v511, %v509
    %v742 = vpack.c.b16 %v514, %v512
    %v743 = vpack.c.b16 %v515, %v513
    %v744 = vpack.c.b16 %v518, %v516
    %v745 = vpack.c.b16 %v519, %v517
    %v746 = vpack.c.b16 %v522, %v520
    %v747 = vpack.c.b16 %v523, %v521
    %v748 = vpack.c.b16 %v526, %v524
    %v749 = vpack.c.b16 %v527, %v525
    %v750 = vpack.c.b16 %v530, %v528
    %v751 = vpack.c.b16 %v531, %v529
    %v752 = vpack.c.b16 %v534, %v532
    %v753 = vpack.c.b16 %v535, %v533
    %v754 = vpack.c.b16 %v538, %v536
    %v755 = vpack.c.b16 %v539, %v537
    %v756 = vpack.c.b16 %v542, %v540
    %v757 = vpack.c.b16 %v543, %v541
    %v758 = vpack.c.b16 %v546, %v544
    %v759 = vpack.c.b16 %v547, %v545
    %v760 = vpack.c.b16 %v550, %v548
    %v761 = vpack.c.b16 %v551, %v549
    %v762 = vpack.c.b16 %v554, %v552
    %v763 = vpack.c.b16 %v555, %v553
    %v764 = vpack.c.b16 %v558, %v556
    %v765 = vpack.c.b16 %v559, %v557
    %v766 = vpack.c.b16 %v562, %v560
    %v767 = vpack.c.b16 %v563, %v561
    %v768 = vpack.c.b16 %v566, %v564
    %v769 = vpack.c.b16 %v567, %v565
    %v770 = vpack.c.b16 %v570, %v568
    %v771 = vpack.c.b16 %v571, %v569
    %v772 = vpack.c.b16 %v574, %v572
    %v773 = vpack.c.b16 %v575, %v573
    %v774 = vpack.c.b16 %v578, %v576
    %v775 = vpack.c.b16 %v579, %v577
    %v776 = vpack.c.b16 %v582, %v580
    %v777 = vpack.c.b16 %v583, %v581
    %v778 = vpack.c.b16 %v586, %v584
    %v779 = vpack.c.b16 %v587, %v585
    %v780 = vpack.c.b16 %v590, %v588
    %v781 = vpack.c.b16 %v591, %v589
    %v782 = vpack.c.b16 %v594, %v592
    %v783 = vpack.c.b16 %v595, %v593
    %v784 = vpack.c.b16 %v598, %v596
    %v785 = vpack.c.b16 %v599, %v597
    %v786 = vpack.c.b16 %v602, %v600
    %v787 = vpack.c.b16 %v603, %v601
    %v788 = vpack.c.b16 %v606, %v604
    %v789 = vpack.c.b16 %v607, %v605
    %v790 = vpack.c.b16 %v610, %v608
    %v791 = vpack.c.b16 %v611, %v609
    %v792 = vpack.c.b16 %v614, %v612
    %v793 = vpack.c.b16 %v615, %v613
    %v794 = vpack.c.b16 %v618, %v616
    %v795 = vpack.c.b16 %v619, %v617
    %v796 = vpack.c.b16 %v622, %v620
    %v797 = vpack.c.b16 %v623, %v621
    %v798 = vpack.c.b16 %v626, %v624
    %v799 = vpack.c.b16 %v627, %v625
    %v800 = vpack.c.b16 %v630, %v628
    %v801 = vpack.c.b16 %v631, %v629
    %v802 = vpack.c.b16 %v634, %v632
    %v803 = vpack.c.b16 %v635, %v633
    %v804 = vpack.c.b16 %v638, %v636
    %v805 = vpack.c.b16 %v639, %v637
    %v806 = vpack.c.b16 %v642, %v640
    %v807 = vpack.c.b16 %v643, %v641
    %v808 = vpack.c.b16 %v646, %v644
    %v809 = vpack.c.b16 %v647, %v645
    %v810 = vpack.c.b16 %v650, %v648
    %v811 = vpack.c.b16 %v651, %v649
    %v812 = vpack.c.b16 %v654, %v652
    %v813 = vpack.c.b16 %v655, %v653
    %v814 = vpack.c.b16 %v658, %v656
    %v815 = vpack.c.b16 %v659, %v657
    %v816 = vpack.c.b16 %v662, %v660
    %v817 = vpack.c.b16 %v663, %v661
    %v818 = vpack.c.b16 %v666, %v664
    %v819 = vpack.c.b16 %v667, %v665
    %v820 = vpack.c.b16 %v670, %v668
    %v821 = vpack.c.b16 %v671, %v669
    %v822 = vpack.c.b16 %v674, %v672
    %v823 = vpack.c.b16 %v675, %v673
    %v824 = vpack.c.b16 %v678, %v676
    %v825 = vpack.c.b16 %v679, %v677
    %v826 = vpack.c.b16 %v682, %v680
    %v827 = vpack.c.b16 %v683, %v681
    %v828 = vpack.c.b16 %v686, %v684
    %v829 = vpack.c.b16 %v687, %v685
    %v830 = vpack.c.b16 %v690, %v688
    %v831 = vpack.c.b16 %v691, %v689
    %v832 = vpack.c.b16 %v694, %v692
    %v833 = vpack.c.b16 %v695, %v693
    %v834 = vpack.c.b16 %v698, %v696
    %v835 = vpack.c.b16 %v699, %v697
    %v836 = vpack.c.b16 %v702, %v700
    %v837 = vpack.c.b16 %v703, %v701
    %v838 = vpack.c.b16 %v706, %v704
    %v839 = vpack.c.b16 %v707, %v705
    %v840 = vpack.c.b16 %v710, %v708
    %v841 = vpack.c.b16 %v711, %v709
    %v842 = vpack.c.b16 %v714, %v712
    %v843 = vpack.c.b16 %v715, %v713
    %972 = vmatpush.bf16.msra.mxu0 %v730
    %973 = vmatpush.bf16.msra.mxu0 %v728
    %974 = vmatpush.bf16.msra.mxu0 %v726
    %975 = vmatpush.bf16.msra.mxu0 %v724
    %976 = vmatpush.bf16.msra.mxu0 %v722
    %977 = vmatpush.bf16.msra.mxu0 %v720
    %978 = vmatpush.bf16.msra.mxu0 %v718
    %979 = vmatpush.bf16.msra.mxu0 %v716
    %980 = vmatmul.bf16.gmra.mxu0 %v316
    %v981 = vpop.f32.mrf.mxu0
    %v982 = vadd.f32 %v300, %v981
    %v983 = vpop.f32.mrf.mxu0
    %984 = vdwg.mxu0
    %985 = vmatpush.bf16.msra.mxu0 %v746
    %986 = vmatpush.bf16.msra.mxu0 %v744
    %987 = vmatpush.bf16.msra.mxu0 %v742
    %988 = vmatpush.bf16.msra.mxu0 %v740
    %989 = vmatpush.bf16.msra.mxu0 %v738
    %990 = vmatpush.bf16.msra.mxu0 %v736
    %991 = vmatpush.bf16.msra.mxu0 %v734
    %992 = vmatpush.bf16.msra.mxu0 %v732
    %993 = vmatmul.bf16.gmra.mxu0 %v317
    %v994 = vpop.f32.mrf.mxu0
    %v995 = vadd.f32 %v982, %v994
    %v996 = vpop.f32.mrf.mxu0
    %997 = vdwg.mxu0
    %998 = vmatpush.bf16.msra.mxu0 %v762
    %999 = vmatpush.bf16.msra.mxu0 %v760
    %1000 = vmatpush.bf16.msra.mxu0 %v758
    %1001 = vmatpush.bf16.msra.mxu0 %v756
    %1002 = vmatpush.bf16.msra.mxu0 %v754
    %1003 = vmatpush.bf16.msra.mxu0 %v752
    %1004 = vmatpush.bf16.msra.mxu0 %v750
    %1005 = vmatpush.bf16.msra.mxu0 %v748
    %1006 = vmatmul.bf16.gmra.mxu0 %v318
    %v1007 = vpop.f32.mrf.mxu0
    %v1008 = vadd.f32 %v995, %v1007
    %v1009 = vpop.f32.mrf.mxu0
    %1010 = vdwg.mxu0
    %1011 = vmatpush.bf16.msra.mxu0 %v778
    %1012 = vmatpush.bf16.msra.mxu0 %v776
    %1013 = vmatpush.bf16.msra.mxu0 %v774
    %1014 = vmatpush.bf16.msra.mxu0 %v772
    %1015 = vmatpush.bf16.msra.mxu0 %v770
    %1016 = vmatpush.bf16.msra.mxu0 %v768
    %1017 = vmatpush.bf16.msra.mxu0 %v766
    %1018 = vmatpush.bf16.msra.mxu0 %v764
    %1019 = vmatmul.bf16.gmra.mxu0 %v319
    %v1020 = vpop.f32.mrf.mxu0
    %v1021 = vadd.f32 %v1008, %v1020
    %v1022 = vpop.f32.mrf.mxu0
    %1023 = vdwg.mxu0
    %1024 = vmatpush.bf16.msra.mxu0 %v794
    %1025 = vmatpush.bf16.msra.mxu0 %v792
    %1026 = vmatpush.bf16.msra.mxu0 %v790
    %1027 = vmatpush.bf16.msra.mxu0 %v788
    %1028 = vmatpush.bf16.msra.mxu0 %v786
    %1029 = vmatpush.bf16.msra.mxu0 %v784
    %1030 = vmatpush.bf16.msra.mxu0 %v782
    %1031 = vmatpush.bf16.msra.mxu0 %v780
    %1032 = vmatmul.bf16.gmra.mxu0 %v320
    %v1033 = vpop.f32.mrf.mxu0
    %v1034 = vadd.f32 %v1021, %v1033
    %v1035 = vpop.f32.mrf.mxu0
    %1036 = vdwg.mxu0
    %1037 = vmatpush.bf16.msra.mxu0 %v810
    %1038 = vmatpush.bf16.msra.mxu0 %v808
    %1039 = vmatpush.bf16.msra.mxu0 %v806
    %1040 = vmatpush.bf16.msra.mxu0 %v804
    %1041 = vmatpush.bf16.msra.mxu0 %v802
    %1042 = vmatpush.bf16.msra.mxu0 %v800
    %1043 = vmatpush.bf16.msra.mxu0 %v798
    %1044 = vmatpush.bf16.msra.mxu0 %v796
    %1045 = vmatmul.bf16.gmra.mxu0 %v321
    %v1046 = vpop.f32.mrf.mxu0
    %v1047 = vadd.f32 %v1034, %v1046
    %v1048 = vpop.f32.mrf.mxu0
    %1049 = vdwg.mxu0
    %1050 = vmatpush.bf16.msra.mxu0 %v826
    %1051 = vmatpush.bf16.msra.mxu0 %v824
    %1052 = vmatpush.bf16.msra.mxu0 %v822
    %1053 = vmatpush.bf16.msra.mxu0 %v820
    %1054 = vmatpush.bf16.msra.mxu0 %v818
    %1055 = vmatpush.bf16.msra.mxu0 %v816
    %1056 = vmatpush.bf16.msra.mxu0 %v814
    %1057 = vmatpush.bf16.msra.mxu0 %v812
    %1058 = vmatmul.bf16.gmra.mxu0 %v322
    %v1059 = vpop.f32.mrf.mxu0
    %v1060 = vadd.f32 %v1047, %v1059
    %v1061 = vpop.f32.mrf.mxu0
    %1062 = vdwg.mxu0
    %1063 = vmatpush.bf16.msra.mxu0 %v842
    %1064 = vmatpush.bf16.msra.mxu0 %v840
    %1065 = vmatpush.bf16.msra.mxu0 %v838
    %1066 = vmatpush.bf16.msra.mxu0 %v836
    %1067 = vmatpush.bf16.msra.mxu0 %v834
    %1068 = vmatpush.bf16.msra.mxu0 %v832
    %1069 = vmatpush.bf16.msra.mxu0 %v830
    %1070 = vmatpush.bf16.msra.mxu0 %v828
    %1071 = vmatmul.bf16.gmra.mxu0 %v323
    %v1072 = vpop.f32.mrf.mxu0
    %v1073 = vadd.f32 %v1060, %v1072
    %v1074 = vpop.f32.mrf.mxu0
    %1075 = vdwg.mxu0
    %1076 = vmatpush.bf16.msra.mxu0 %v731
    %1077 = vmatpush.bf16.msra.mxu0 %v729
    %1078 = vmatpush.bf16.msra.mxu0 %v727
    %1079 = vmatpush.bf16.msra.mxu0 %v725
    %1080 = vmatpush.bf16.msra.mxu0 %v723
    %1081 = vmatpush.bf16.msra.mxu0 %v721
    %1082 = vmatpush.bf16.msra.mxu0 %v719
    %1083 = vmatpush.bf16.msra.mxu0 %v717
    %1084 = vmatmul.bf16.gmra.mxu0 %v316
    %v1085 = vpop.f32.mrf.mxu0
    %v1086 = vadd.f32 %v301, %v1085
    %v1087 = vpop.f32.mrf.mxu0
    %1088 = vdwg.mxu0
    %1089 = vmatpush.bf16.msra.mxu0 %v747
    %1090 = vmatpush.bf16.msra.mxu0 %v745
    %1091 = vmatpush.bf16.msra.mxu0 %v743
    %1092 = vmatpush.bf16.msra.mxu0 %v741
    %1093 = vmatpush.bf16.msra.mxu0 %v739
    %1094 = vmatpush.bf16.msra.mxu0 %v737
    %1095 = vmatpush.bf16.msra.mxu0 %v735
    %1096 = vmatpush.bf16.msra.mxu0 %v733
    %1097 = vmatmul.bf16.gmra.mxu0 %v317
    %v1098 = vpop.f32.mrf.mxu0
    %v1099 = vadd.f32 %v1086, %v1098
    %v1100 = vpop.f32.mrf.mxu0
    %1101 = vdwg.mxu0
    %1102 = vmatpush.bf16.msra.mxu0 %v763
    %1103 = vmatpush.bf16.msra.mxu0 %v761
    %1104 = vmatpush.bf16.msra.mxu0 %v759
    %1105 = vmatpush.bf16.msra.mxu0 %v757
    %1106 = vmatpush.bf16.msra.mxu0 %v755
    %1107 = vmatpush.bf16.msra.mxu0 %v753
    %1108 = vmatpush.bf16.msra.mxu0 %v751
    %1109 = vmatpush.bf16.msra.mxu0 %v749
    %1110 = vmatmul.bf16.gmra.mxu0 %v318
    %v1111 = vpop.f32.mrf.mxu0
    %v1112 = vadd.f32 %v1099, %v1111
    %v1113 = vpop.f32.mrf.mxu0
    %1114 = vdwg.mxu0
    %1115 = vmatpush.bf16.msra.mxu0 %v779
    %1116 = vmatpush.bf16.msra.mxu0 %v777
    %1117 = vmatpush.bf16.msra.mxu0 %v775
    %1118 = vmatpush.bf16.msra.mxu0 %v773
    %1119 = vmatpush.bf16.msra.mxu0 %v771
    %1120 = vmatpush.bf16.msra.mxu0 %v769
    %1121 = vmatpush.bf16.msra.mxu0 %v767
    %1122 = vmatpush.bf16.msra.mxu0 %v765
    %1123 = vmatmul.bf16.gmra.mxu0 %v319
    %v1124 = vpop.f32.mrf.mxu0
    %v1125 = vadd.f32 %v1112, %v1124
    %v1126 = vpop.f32.mrf.mxu0
    %1127 = vdwg.mxu0
    %1128 = vmatpush.bf16.msra.mxu0 %v795
    %1129 = vmatpush.bf16.msra.mxu0 %v793
    %1130 = vmatpush.bf16.msra.mxu0 %v791
    %1131 = vmatpush.bf16.msra.mxu0 %v789
    %1132 = vmatpush.bf16.msra.mxu0 %v787
    %1133 = vmatpush.bf16.msra.mxu0 %v785
    %1134 = vmatpush.bf16.msra.mxu0 %v783
    %1135 = vmatpush.bf16.msra.mxu0 %v781
    %1136 = vmatmul.bf16.gmra.mxu0 %v320
    %v1137 = vpop.f32.mrf.mxu0
    %v1138 = vadd.f32 %v1125, %v1137
    %v1139 = vpop.f32.mrf.mxu0
    %1140 = vdwg.mxu0
    %1141 = vmatpush.bf16.msra.mxu0 %v811
    %1142 = vmatpush.bf16.msra.mxu0 %v809
    %1143 = vmatpush.bf16.msra.mxu0 %v807
    %1144 = vmatpush.bf16.msra.mxu0 %v805
    %1145 = vmatpush.bf16.msra.mxu0 %v803
    %1146 = vmatpush.bf16.msra.mxu0 %v801
    %1147 = vmatpush.bf16.msra.mxu0 %v799
    %1148 = vmatpush.bf16.msra.mxu0 %v797
    %1149 = vmatmul.bf16.gmra.mxu0 %v321
    %v1150 = vpop.f32.mrf.mxu0
    %v1151 = vadd.f32 %v1138, %v1150
    %v1152 = vpop.f32.mrf.mxu0
    %1153 = vdwg.mxu0
    %1154 = vmatpush.bf16.msra.mxu0 %v827
    %1155 = vmatpush.bf16.msra.mxu0 %v825
    %1156 = vmatpush.bf16.msra.mxu0 %v823
    %1157 = vmatpush.bf16.msra.mxu0 %v821
    %1158 = vmatpush.bf16.msra.mxu0 %v819
    %1159 = vmatpush.bf16.msra.mxu0 %v817
    %1160 = vmatpush.bf16.msra.mxu0 %v815
    %1161 = vmatpush.bf16.msra.mxu0 %v813
    %1162 = vmatmul.bf16.gmra.mxu0 %v322
    %v1163 = vpop.f32.mrf.mxu0
    %v1164 = vadd.f32 %v1151, %v1163
    %v1165 = vpop.f32.mrf.mxu0
    %1166 = vdwg.mxu0
    %1167 = vmatpush.bf16.msra.mxu0 %v843
    %1168 = vmatpush.bf16.msra.mxu0 %v841
    %1169 = vmatpush.bf16.msra.mxu0 %v839
    %1170 = vmatpush.bf16.msra.mxu0 %v837
    %1171 = vmatpush.bf16.msra.mxu0 %v835
    %1172 = vmatpush.bf16.msra.mxu0 %v833
    %1173 = vmatpush.bf16.msra.mxu0 %v831
    %1174 = vmatpush.bf16.msra.mxu0 %v829
    %1175 = vmatmul.bf16.gmra.mxu0 %v323
    %v1176 = vpop.f32.mrf.mxu0
    %v1177 = vadd.f32 %v1164, %v1176
    %v1178 = vpop.f32.mrf.mxu0
    %1179 = vdwg.mxu0
    %v1180 = vmul.f32 %v1073, 0.1
    %v1181 = vmul.f32 %v1177, 0.1
    %v1182 = vmax.f32 %v1073, %v1180
    %v1183 = vmax.f32 %v1177, %v1181
    %v1184 = vpack.c.bf16 %v1182, %v1182
    %v1185 = vpack.c.bf16 %v1183, %v1183
    %v1186 = vld [vmem:[#allocation8] sm:$0xf]
    %v1187 = vld [vmem:[#allocation8 + $0x4] sm:$0xf]
    %v1188 = vld [vmem:[#allocation8 + $0x8] sm:$0xf]
    %v1189 = vld [vmem:[#allocation8 + $0xc] sm:$0xf]
    %v1190 = vld [vmem:[#allocation8 + $0x10] sm:$0xf]
    %v1191 = vld [vmem:[#allocation8 + $0x14] sm:$0xf]
    %v1192 = vld [vmem:[#allocation8 + $0x18] sm:$0xf]
    %v1193 = vld [vmem:[#allocation8 + $0x1c] sm:$0xf]
    %v1194 = vld [vmem:[#allocation8 + $0x20] sm:$0xf]
    %v1195 = vld [vmem:[#allocation8 + $0x24] sm:$0xf]
    %v1196 = vld [vmem:[#allocation8 + $0x28] sm:$0xf]
    %v1197 = vld [vmem:[#allocation8 + $0x2c] sm:$0xf]
    %v1198 = vld [vmem:[#allocation8 + $0x30] sm:$0xf]
    %v1199 = vld [vmem:[#allocation8 + $0x34] sm:$0xf]
    %v1200 = vld [vmem:[#allocation8 + $0x38] sm:$0xf]
    %v1201 = vld [vmem:[#allocation8 + $0x3c] sm:$0xf]
    %v1202 = vld [vmem:[#allocation8 + $0x40] sm:$0xf]
    %v1203 = vld [vmem:[#allocation8 + $0x44] sm:$0xf]
    %v1204 = vld [vmem:[#allocation8 + $0x48] sm:$0xf]
    %v1205 = vld [vmem:[#allocation8 + $0x4c] sm:$0xf]
    %v1206 = vld [vmem:[#allocation8 + $0x50] sm:$0xf]
    %v1207 = vld [vmem:[#allocation8 + $0x54] sm:$0xf]
    %v1208 = vld [vmem:[#allocation8 + $0x58] sm:$0xf]
    %v1209 = vld [vmem:[#allocation8 + $0x5c] sm:$0xf]
    %v1210 = vld [vmem:[#allocation8 + $0x60] sm:$0xf]
    %v1211 = vld [vmem:[#allocation8 + $0x64] sm:$0xf]
    %v1212 = vld [vmem:[#allocation8 + $0x68] sm:$0xf]
    %v1213 = vld [vmem:[#allocation8 + $0x6c] sm:$0xf]
    %v1214 = vld [vmem:[#allocation8 + $0x70] sm:$0xf]
    %v1215 = vld [vmem:[#allocation8 + $0x74] sm:$0xf]
    %v1216 = vld [vmem:[#allocation8 + $0x78] sm:$0xf]
    %v1217 = vld [vmem:[#allocation8 + $0x7c] sm:$0xf]
    %v1218 = vld [vmem:[%s4] sm:$0x1]
    %v1220 = vperm.slane %v1218, 0
    %v1254 = vunpack.c.l.b16 %v1186
    %v1255 = vunpack.c.l.b16 %v1187
    %v1256 = vunpack.c.l.b16 %v1188
    %v1257 = vunpack.c.l.b16 %v1189
    %v1258 = vunpack.c.l.b16 %v1190
    %v1259 = vunpack.c.l.b16 %v1191
    %v1260 = vunpack.c.l.b16 %v1192
    %v1261 = vunpack.c.l.b16 %v1193
    %v1262 = vunpack.c.l.b16 %v1194
    %v1263 = vunpack.c.l.b16 %v1195
    %v1264 = vunpack.c.l.b16 %v1196
    %v1265 = vunpack.c.l.b16 %v1197
    %v1266 = vunpack.c.l.b16 %v1198
    %v1267 = vunpack.c.l.b16 %v1199
    %v1268 = vunpack.c.l.b16 %v1200
    %v1269 = vunpack.c.l.b16 %v1201
    %v1270 = vunpack.c.l.b16 %v1202
    %v1271 = vunpack.c.l.b16 %v1203
    %v1272 = vunpack.c.l.b16 %v1204
    %v1273 = vunpack.c.l.b16 %v1205
    %v1274 = vunpack.c.l.b16 %v1206
    %v1275 = vunpack.c.l.b16 %v1207
    %v1276 = vunpack.c.l.b16 %v1208
    %v1277 = vunpack.c.l.b16 %v1209
    %v1278 = vunpack.c.l.b16 %v1210
    %v1279 = vunpack.c.l.b16 %v1211
    %v1280 = vunpack.c.l.b16 %v1212
    %v1281 = vunpack.c.l.b16 %v1213
    %v1282 = vunpack.c.l.b16 %v1214
    %v1283 = vunpack.c.l.b16 %v1215
    %v1284 = vunpack.c.l.b16 %v1216
    %v1285 = vunpack.c.l.b16 %v1217
    %v1286 = vpack.c.b16 %v1255, %v1254
    %v1287 = vpack.c.b16 %v1257, %v1256
    %v1288 = vpack.c.b16 %v1259, %v1258
    %v1289 = vpack.c.b16 %v1261, %v1260
    %v1290 = vpack.c.b16 %v1263, %v1262
    %v1291 = vpack.c.b16 %v1265, %v1264
    %v1292 = vpack.c.b16 %v1267, %v1266
    %v1293 = vpack.c.b16 %v1269, %v1268
    %v1294 = vpack.c.b16 %v1271, %v1270
    %v1295 = vpack.c.b16 %v1273, %v1272
    %v1296 = vpack.c.b16 %v1275, %v1274
    %v1297 = vpack.c.b16 %v1277, %v1276
    %v1298 = vpack.c.b16 %v1279, %v1278
    %v1299 = vpack.c.b16 %v1281, %v1280
    %v1300 = vpack.c.b16 %v1283, %v1282
    %v1301 = vpack.c.b16 %v1285, %v1284
    %1318 = vmatpush.bf16.msra.mxu0 %v1293
    %1319 = vmatpush.bf16.msra.mxu0 %v1292
    %1320 = vmatpush.bf16.msra.mxu0 %v1291
    %1321 = vmatpush.bf16.msra.mxu0 %v1290
    %1322 = vmatpush.bf16.msra.mxu0 %v1289
    %1323 = vmatpush.bf16.msra.mxu0 %v1288
    %1324 = vmatpush.bf16.msra.mxu0 %v1287
    %1325 = vmatpush.bf16.msra.mxu0 %v1286
    %1326 = vmatmul.bf16.gmra.mxu0 %v1184
    %v1327 = vpop.f32.mrf.mxu0
    %v1328 = vadd.f32 %v1220, %v1327
    %v1329 = vpop.f32.mrf.mxu0
    %1330 = vdwg.mxu0
    %1331 = vmatpush.bf16.msra.mxu0 %v1301
    %1332 = vmatpush.bf16.msra.mxu0 %v1300
    %1333 = vmatpush.bf16.msra.mxu0 %v1299
    %1334 = vmatpush.bf16.msra.mxu0 %v1298
    %1335 = vmatpush.bf16.msra.mxu0 %v1297
    %1336 = vmatpush.bf16.msra.mxu0 %v1296
    %1337 = vmatpush.bf16.msra.mxu0 %v1295
    %1338 = vmatpush.bf16.msra.mxu0 %v1294
    %1339 = vmatmul.bf16.gmra.mxu0 %v1185
    %v1340 = vpop.f32.mrf.mxu0
    %v1341 = vadd.f32 %v1328, %v1340
    %v1342 = vpop.f32.mrf.mxu0
    %1343 = vdwg.mxu0
    %v1344 = vmul.f32 %v1341, 0.1
    %v1345 = vmax.f32 %v1341, %v1344
    %v1346 = vpack.c.bf16 %v1345, %v1345
    %v1347 = vld [vmem:[#allocation10] sm:$0xf]
    %v1348 = vld [vmem:[#allocation10 + $0x4] sm:$0xf]
    %v1349 = vld [vmem:[#allocation10 + $0x8] sm:$0xf]
    %v1350 = vld [vmem:[#allocation10 + $0xc] sm:$0xf]
    %v1351 = vld [vmem:[#allocation10 + $0x10] sm:$0xf]
    %v1352 = vld [vmem:[#allocation10 + $0x14] sm:$0xf]
    %v1353 = vld [vmem:[#allocation10 + $0x18] sm:$0xf]
    %v1354 = vld [vmem:[#allocation10 + $0x1c] sm:$0xf]
    %v1355 = vld [vmem:[#allocation10 + $0x20] sm:$0xf]
    %v1356 = vld [vmem:[#allocation10 + $0x24] sm:$0xf]
    %v1357 = vld [vmem:[#allocation10 + $0x28] sm:$0xf]
    %v1358 = vld [vmem:[#allocation10 + $0x2c] sm:$0xf]
    %v1359 = vld [vmem:[#allocation10 + $0x30] sm:$0xf]
    %v1360 = vld [vmem:[#allocation10 + $0x34] sm:$0xf]
    %v1361 = vld [vmem:[#allocation10 + $0x38] sm:$0xf]
    %v1362 = vld [vmem:[#allocation10 + $0x3c] sm:$0xf]
    %v1363 = vld [vmem:[%s6] sm:$0x1]
    %v1365 = vperm.slane %v1363, 0
    %v1383 = vunpack.c.l.b16 %v1347
    %v1384 = vunpack.c.l.b16 %v1348
    %v1385 = vunpack.c.l.b16 %v1349
    %v1386 = vunpack.c.l.b16 %v1350
    %v1387 = vunpack.c.l.b16 %v1351
    %v1388 = vunpack.c.l.b16 %v1352
    %v1389 = vunpack.c.l.b16 %v1353
    %v1390 = vunpack.c.l.b16 %v1354
    %v1391 = vunpack.c.l.b16 %v1355
    %v1392 = vunpack.c.l.b16 %v1356
    %v1393 = vunpack.c.l.b16 %v1357
    %v1394 = vunpack.c.l.b16 %v1358
    %v1395 = vunpack.c.l.b16 %v1359
    %v1396 = vunpack.c.l.b16 %v1360
    %v1397 = vunpack.c.l.b16 %v1361
    %v1398 = vunpack.c.l.b16 %v1362
    %v1399 = vpack.c.b16 %v1384, %v1383
    %v1400 = vpack.c.b16 %v1386, %v1385
    %v1401 = vpack.c.b16 %v1388, %v1387
    %v1402 = vpack.c.b16 %v1390, %v1389
    %v1403 = vpack.c.b16 %v1392, %v1391
    %v1404 = vpack.c.b16 %v1394, %v1393
    %v1405 = vpack.c.b16 %v1396, %v1395
    %v1406 = vpack.c.b16 %v1398, %v1397
    %1415 = vmatpush.bf16.msra.mxu0 %v1406
    %1416 = vmatpush.bf16.msra.mxu0 %v1405
    %1417 = vmatpush.bf16.msra.mxu0 %v1404
    %1418 = vmatpush.bf16.msra.mxu0 %v1403
    %1419 = vmatpush.bf16.msra.mxu0 %v1402
    %1420 = vmatpush.bf16.msra.mxu0 %v1401
    %1421 = vmatpush.bf16.msra.mxu0 %v1400
    %1422 = vmatpush.bf16.msra.mxu0 %v1399
    %1423 = vmatmul.bf16.gmra.mxu0 %v1346
    %v1424 = vpop.f32.mrf.mxu0
    %v1425 = vadd.f32 %v1365, %v1424
    %v1426 = vpop.f32.mrf.mxu0
    %1427 = vdwg.mxu0
    %v1428 = vmul.f32 %v1425, 0.1
    %v1429 = vmax.f32 %v1425, %v1428
    %v1430 = vpack.c.bf16 %v1429, %v1429
    %v1431 = vld [vmem:[#allocation11] sm:$0xf]
    %v1432 = vld [vmem:[#allocation11 + $0x4] sm:$0xf]
    %v1433 = vld [vmem:[#allocation11 + $0x8] sm:$0xf]
    %v1434 = vld [vmem:[#allocation11 + $0xc] sm:$0xf]
    %v1435 = vld [vmem:[#allocation11 + $0x10] sm:$0xf]
    %v1436 = vld [vmem:[#allocation11 + $0x14] sm:$0xf]
    %v1437 = vld [vmem:[#allocation11 + $0x18] sm:$0xf]
    %v1438 = vld [vmem:[#allocation11 + $0x1c] sm:$0xf]
    %v1439 = vld [vmem:[#allocation11 + $0x20] sm:$0xf]
    %v1440 = vld [vmem:[#allocation11 + $0x24] sm:$0xf]
    %v1441 = vld [vmem:[#allocation11 + $0x28] sm:$0xf]
    %v1442 = vld [vmem:[#allocation11 + $0x2c] sm:$0xf]
    %v1443 = vld [vmem:[#allocation11 + $0x30] sm:$0xf]
    %v1444 = vld [vmem:[#allocation11 + $0x34] sm:$0xf]
    %v1445 = vld [vmem:[#allocation11 + $0x38] sm:$0xf]
    %v1446 = vld [vmem:[#allocation11 + $0x3c] sm:$0xf]
    %v1447 = vld [vmem:[%s8] sm:$0x1]
    %v1449 = vperm.slane %v1447, 0
    %v1467 = vunpack.c.l.b16 %v1431
    %v1468 = vunpack.c.l.b16 %v1432
    %v1469 = vunpack.c.l.b16 %v1433
    %v1470 = vunpack.c.l.b16 %v1434
    %v1471 = vunpack.c.l.b16 %v1435
    %v1472 = vunpack.c.l.b16 %v1436
    %v1473 = vunpack.c.l.b16 %v1437
    %v1474 = vunpack.c.l.b16 %v1438
    %v1475 = vunpack.c.l.b16 %v1439
    %v1476 = vunpack.c.l.b16 %v1440
    %v1477 = vunpack.c.l.b16 %v1441
    %v1478 = vunpack.c.l.b16 %v1442
    %v1479 = vunpack.c.l.b16 %v1443
    %v1480 = vunpack.c.l.b16 %v1444
    %v1481 = vunpack.c.l.b16 %v1445
    %v1482 = vunpack.c.l.b16 %v1446
    %v1483 = vpack.c.b16 %v1468, %v1467
    %v1484 = vpack.c.b16 %v1470, %v1469
    %v1485 = vpack.c.b16 %v1472, %v1471
    %v1486 = vpack.c.b16 %v1474, %v1473
    %v1487 = vpack.c.b16 %v1476, %v1475
    %v1488 = vpack.c.b16 %v1478, %v1477
    %v1489 = vpack.c.b16 %v1480, %v1479
    %v1490 = vpack.c.b16 %v1482, %v1481
    %1499 = vmatpush.bf16.msra.mxu0 %v1490
    %1500 = vmatpush.bf16.msra.mxu0 %v1489
    %1501 = vmatpush.bf16.msra.mxu0 %v1488
    %1502 = vmatpush.bf16.msra.mxu0 %v1487
    %1503 = vmatpush.bf16.msra.mxu0 %v1486
    %1504 = vmatpush.bf16.msra.mxu0 %v1485
    %1505 = vmatpush.bf16.msra.mxu0 %v1484
    %1506 = vmatpush.bf16.msra.mxu0 %v1483
    %1507 = vmatmul.bf16.gmra.mxu0 %v1430
    %v1508 = vpop.f32.mrf.mxu0
    %v1509 = vadd.f32 %v1449, %v1508
    %v1510 = vpop.f32.mrf.mxu0
    %1511 = vdwg.mxu0
    %v1512 = vmul.f32 %v1509, 0.1
    %v1513 = vmax.f32 %v1509, %v1512
    %v1514 = vpack.c.bf16 %v1513, %v1513
    %v1515 = vld [vmem:[#allocation13] sm:$0xf]
    %v1516 = vld [vmem:[#allocation13 + $0x4] sm:$0xf]
    %v1517 = vld [vmem:[#allocation13 + $0x8] sm:$0xf]
    %v1518 = vld [vmem:[#allocation13 + $0xc] sm:$0xf]
    %v1519 = vld [vmem:[#allocation13 + $0x10] sm:$0xf]
    %v1520 = vld [vmem:[#allocation13 + $0x14] sm:$0xf]
    %v1521 = vld [vmem:[#allocation13 + $0x18] sm:$0xf]
    %v1522 = vld [vmem:[#allocation13 + $0x1c] sm:$0xf]
    %v1523 = vld [vmem:[#allocation13 + $0x20] sm:$0xf]
    %v1524 = vld [vmem:[#allocation13 + $0x24] sm:$0xf]
    %v1525 = vld [vmem:[#allocation13 + $0x28] sm:$0xf]
    %v1526 = vld [vmem:[#allocation13 + $0x2c] sm:$0xf]
    %v1527 = vld [vmem:[#allocation13 + $0x30] sm:$0xf]
    %v1528 = vld [vmem:[#allocation13 + $0x34] sm:$0xf]
    %v1529 = vld [vmem:[#allocation13 + $0x38] sm:$0xf]
    %v1530 = vld [vmem:[#allocation13 + $0x3c] sm:$0xf]
    %v1531 = vld [vmem:[%s10] sm:$0x1]
    %v1533 = vperm.slane %v1531, 0
    %v1551 = vunpack.c.l.b16 %v1515
    %v1552 = vunpack.c.l.b16 %v1516
    %v1553 = vunpack.c.l.b16 %v1517
    %v1554 = vunpack.c.l.b16 %v1518
    %v1555 = vunpack.c.l.b16 %v1519
    %v1556 = vunpack.c.l.b16 %v1520
    %v1557 = vunpack.c.l.b16 %v1521
    %v1558 = vunpack.c.l.b16 %v1522
    %v1559 = vunpack.c.l.b16 %v1523
    %v1560 = vunpack.c.l.b16 %v1524
    %v1561 = vunpack.c.l.b16 %v1525
    %v1562 = vunpack.c.l.b16 %v1526
    %v1563 = vunpack.c.l.b16 %v1527
    %v1564 = vunpack.c.l.b16 %v1528
    %v1565 = vunpack.c.l.b16 %v1529
    %v1566 = vunpack.c.l.b16 %v1530
    %v1567 = vpack.c.b16 %v1552, %v1551
    %v1568 = vpack.c.b16 %v1554, %v1553
    %v1569 = vpack.c.b16 %v1556, %v1555
    %v1570 = vpack.c.b16 %v1558, %v1557
    %v1571 = vpack.c.b16 %v1560, %v1559
    %v1572 = vpack.c.b16 %v1562, %v1561
    %v1573 = vpack.c.b16 %v1564, %v1563
    %v1574 = vpack.c.b16 %v1566, %v1565
    %1583 = vmatpush.bf16.msra.mxu0 %v1574
    %1584 = vmatpush.bf16.msra.mxu0 %v1573
    %1585 = vmatpush.bf16.msra.mxu0 %v1572
    %1586 = vmatpush.bf16.msra.mxu0 %v1571
    %1587 = vmatpush.bf16.msra.mxu0 %v1570
    %1588 = vmatpush.bf16.msra.mxu0 %v1569
    %1589 = vmatpush.bf16.msra.mxu0 %v1568
    %1590 = vmatpush.bf16.msra.mxu0 %v1567
    %1591 = vmatmul.bf16.gmra.mxu0 %v1514
    %v1592 = vpop.f32.mrf.mxu0
    %v1593 = vadd.f32 %v1533, %v1592
    %v1594 = vpop.f32.mrf.mxu0
    %1595 = vdwg.mxu0
    %v1596 = vmul.f32 %v1593, 0.1
    %v1597 = vmax.f32 %v1593, %v1596
    %v1598 = vpack.c.bf16 %v1597, %v1597
    %v1599 = vld [vmem:[#allocation14] sm:$0xf]
    %v1600 = vld [vmem:[#allocation14 + $0x4] sm:$0xf]
    %v1601 = vld [vmem:[#allocation14 + $0x8] sm:$0xf]
    %v1602 = vld [vmem:[#allocation14 + $0xc] sm:$0xf]
    %v1603 = vld [vmem:[#allocation14 + $0x10] sm:$0xf]
    %v1604 = vld [vmem:[#allocation14 + $0x14] sm:$0xf]
    %v1605 = vld [vmem:[#allocation14 + $0x18] sm:$0xf]
    %v1606 = vld [vmem:[#allocation14 + $0x1c] sm:$0xf]
    %v1607 = vld [vmem:[#allocation14 + $0x20] sm:$0xf]
    %v1608 = vld [vmem:[#allocation14 + $0x24] sm:$0xf]
    %v1609 = vld [vmem:[#allocation14 + $0x28] sm:$0xf]
    %v1610 = vld [vmem:[#allocation14 + $0x2c] sm:$0xf]
    %v1611 = vld [vmem:[#allocation14 + $0x30] sm:$0xf]
    %v1612 = vld [vmem:[#allocation14 + $0x34] sm:$0xf]
    %v1613 = vld [vmem:[#allocation14 + $0x38] sm:$0xf]
    %v1614 = vld [vmem:[#allocation14 + $0x3c] sm:$0xf]
    %v1615 = vld [vmem:[%s12] sm:$0x1]
    %v1617 = vperm.slane %v1615, 0
    %v1635 = vunpack.c.l.b16 %v1599
    %v1636 = vunpack.c.l.b16 %v1600
    %v1637 = vunpack.c.l.b16 %v1601
    %v1638 = vunpack.c.l.b16 %v1602
    %v1639 = vunpack.c.l.b16 %v1603
    %v1640 = vunpack.c.l.b16 %v1604
    %v1641 = vunpack.c.l.b16 %v1605
    %v1642 = vunpack.c.l.b16 %v1606
    %v1643 = vunpack.c.l.b16 %v1607
    %v1644 = vunpack.c.l.b16 %v1608
    %v1645 = vunpack.c.l.b16 %v1609
    %v1646 = vunpack.c.l.b16 %v1610
    %v1647 = vunpack.c.l.b16 %v1611
    %v1648 = vunpack.c.l.b16 %v1612
    %v1649 = vunpack.c.l.b16 %v1613
    %v1650 = vunpack.c.l.b16 %v1614
    %v1651 = vpack.c.b16 %v1636, %v1635
    %v1652 = vpack.c.b16 %v1638, %v1637
    %v1653 = vpack.c.b16 %v1640, %v1639
    %v1654 = vpack.c.b16 %v1642, %v1641
    %v1655 = vpack.c.b16 %v1644, %v1643
    %v1656 = vpack.c.b16 %v1646, %v1645
    %v1657 = vpack.c.b16 %v1648, %v1647
    %v1658 = vpack.c.b16 %v1650, %v1649
    %1667 = vmatpush.bf16.msra.mxu0 %v1658
    %1668 = vmatpush.bf16.msra.mxu0 %v1657
    %1669 = vmatpush.bf16.msra.mxu0 %v1656
    %1670 = vmatpush.bf16.msra.mxu0 %v1655
    %1671 = vmatpush.bf16.msra.mxu0 %v1654
    %1672 = vmatpush.bf16.msra.mxu0 %v1653
    %1673 = vmatpush.bf16.msra.mxu0 %v1652
    %1674 = vmatpush.bf16.msra.mxu0 %v1651
    %1675 = vmatmul.bf16.gmra.mxu0 %v1598
    %v1676 = vpop.f32.mrf.mxu0
    %v1677 = vadd.f32 %v1617, %v1676
    %v1678 = vpop.f32.mrf.mxu0
    %1679 = vdwg.mxu0
    %1680 = vmax.xlane.f32.xlu0 %v1677
    %v1681 = vpop.xlane.xlu0 %1680
    %v1682 = vsub.f32 %v1677, %v1681
    %v1683 = vmul.f32 %v1682, 1.442695
    %v1684 = vpow.pop %v1683
    %1685 = vadd.xlane.f32.xlu0 %v1684
    %v1686 = vpop.xlane.xlu0 %1685
    %v1687 = vlog2.pop %v1686
    %v1688 = vmul.f32 %v1687, 0.6931472
    %v1689 = vsub.f32 %v1682, %v1688
    %1690 = vst [vmem:[#allocation16] sm:$0xff] %v1689
    // Predicated region
    $region86: #{tpu_custom_call.1} parent=1 // pred_check
      _
    $region87: #{tpu_custom_call.1} parent=1 // pred_check_branch
      %1692 = sbr.rel (0) target = $region89
    $region88: #{tpu_custom_call.1} parent=1 // pred_region
      %1694 = vsyncadd [#allocation4], 0
      %s1696 = sshll.u32 [#allocation16], 4
      %s1697 = int_to_ptr.vmem [resolvable:$true] %s1696
      %s1698 = sshll.u32 %s13, 4
      %s1699 = int_to_ptr.hbm [resolvable:$true] %s1698
      %1701 = dma.vmem_to_hbm [thread:$0]  %s1697, 128, %s1699, [#allocation4]
    $region89: #{tpu_custom_call.1} parent=1 // pred_fallthru
      _
    // Predicated region
    $region90: #{tpu_custom_call.1} parent=1 // pred_check
      _
    $region91: #{tpu_custom_call.1} parent=1 // pred_check_branch
      %1703 = sbr.rel (0) target = $region93
    $region92: #{tpu_custom_call.1} parent=1 // pred_region
      %1705 = dma.done [#allocation4], 128
    $region93: #{tpu_custom_call.1} parent=1 // pred_fallthru
      _
    %1706 = vsyncpa [#allocation3], 1
    %1707 = vsyncpa [#allocation6], 1
    %1708 = vsyncpa [#allocation9], 1
    %1709 = vsyncpa [#allocation12], 1
    %1710 = vsyncpa [#allocation15], 1
    %1711 = vsyncpa [#allocation4], 1

</llo_original>
